<compile_context>
chip_gen: v7x
topology: tpu7x:2x2x1
jax: 0.10.0
libtpu: 0.0.40
codegen_flags: <defaults>
</compile_context>

<pallas_src>
import math

import jax
import jax.numpy as jnp
from jax.experimental import pallas as pl
from jax.experimental.pallas import tpu as pltpu

_LANE = 128
_PALLAS_MIN_BYTES = 1 * 1024 * 1024  # below this, leave the op to XLA fusion


def _tile_bytes_for_device() -> int:
    """Per-array VMEM tile budget (3 arrays x 2 buffers must fit scoped VMEM)."""
    try:
        kind = jax.devices()[0].device_kind.lower()
    except Exception:  # pragma: no cover - defensive
        return 2 * 1024 * 1024
    if "v7" in kind or "7x" in kind:
        # 3.2 TB/s HBM: amortize ~0.35us/step overhead. 6 x 5 MiB = 30 MiB < 32 MiB.
        return 5 * 1024 * 1024
    if "v6" in kind:
        # 6 x 4 MiB = 24 MiB < 32 MiB scoped default.
        return 4 * 1024 * 1024
    # v5e and older: scoped default is only 16 MiB -> keep 6 x 2 MiB = 12 MiB.
    return 2 * 1024 * 1024


def _choose_width(n_elem: int):
    """Widest lane-dense last dim (multiple of 128) that divides n_elem."""
    for w in (4096, 2048, 1024, 512, 256, _LANE):
        if n_elem % w == 0:
            return w
    return None


def _round_up(x: int, m: int) -> int:
    return ((x + m - 1) // m) * m


def _reluloss_kernel(in_ref, tgt_ref, out_ref):
    # Pure VPU elementwise on the current tile.  tgt_ref is either the matching
    # (block_rows, width) tile or a (1, 1) scalar block broadcast on the VPU.
    out_ref[...] = jnp.maximum(in_ref[...] - tgt_ref[...], 0)


def _reluloss_fallback(inp, target, out_dtype):
    return jnp.maximum(inp.astype(out_dtype) - target.astype(out_dtype), 0)


def reluloss(inp: jax.Array, target: jax.Array) -> jax.Array:
    """Pallas TPU implementation of Reluloss.forward: relu(input - target)."""
    inp = jnp.asarray(inp)
    target = jnp.asarray(target)
    out_dtype = jnp.result_type(inp.dtype, target.dtype)
    out_shape = jnp.broadcast_shapes(inp.shape, target.shape)

    n_out = math.prod(out_shape) if out_shape else 1
    itemsize = jnp.dtype(out_dtype).itemsize

    same_shape = inp.shape == target.shape
    scalar_target = (target.size == 1) and (inp.shape == tuple(out_shape))

    # Tiny inputs, general broadcasting, and awkward sizes: let XLA fuse it.
    if (n_out * itemsize < _PALLAS_MIN_BYTES) or not (same_shape or scalar_target):
        return _reluloss_fallback(inp, target, out_dtype)

    width = _choose_width(n_out)
    if width is None:  # not a multiple of 128 lanes: no pad/slice passes, just fuse
        return _reluloss_fallback(inp, target, out_dtype)

    rows = n_out // width
    x2d = inp.astype(out_dtype).reshape(rows, width)

    # Sublane multiple per dtype (f32: 8, bf16: 16, int8/fp8: 32).
    sub = {4: 8, 2: 16, 1: 32}.get(itemsize, 8)

    tile_bytes = _tile_bytes_for_device()
    max_block_rows = max(sub, (tile_bytes // (width * itemsize)) // sub * sub)

    # Target >= 4 grid steps so v7x can shard across both TensorCores and the
    # pipeline overlaps DMA with VPU work; clamp to the VMEM budget.
    block_rows = min(max_block_rows, max(sub, _round_up(pl.cdiv(rows, 4), sub)))
    grid = (pl.cdiv(rows, block_rows),)

    row_spec = pl.BlockSpec((block_rows, width), lambda i: (i, 0))

    if same_shape:
        t_arr = target.astype(out_dtype).reshape(rows, width)
        tgt_spec = pl.BlockSpec((block_rows, width), lambda i: (i, 0))
    else:
        # Scalar target: keep it as a (1, 1) block, broadcast in-kernel on the
        # VPU -- no full-size HBM materialization of the broadcast operand.
        t_arr = target.astype(out_dtype).reshape(1, 1)
        tgt_spec = pl.BlockSpec((1, 1), lambda i: (0, 0))

    out2d = pl.pallas_call(
        _reluloss_kernel,
        out_shape=jax.ShapeDtypeStruct((rows, width), out_dtype),
        grid=grid,
        in_specs=[row_spec, tgt_spec],
        out_specs=pl.BlockSpec((block_rows, width), lambda i: (i, 0)),
        compiler_params=pltpu.CompilerParams(
            # Independent tiles -> shard across TensorCores where available.
            dimension_semantics=("parallel",),
        ),
    )(x2d, t_arr)

    return out2d.reshape(out_shape)


if __name__ == "__main__":
    key = jax.random.PRNGKey(0)
    k1, k2 = jax.random.split(key)

    # 1) Small NCHW prediction/target pair consistent with the PyTorch module
    #    (tiny -> routed to the fused XLA path by design).
    x = jax.random.normal(k1, (2, 4, 16, 16), dtype=jnp.float32)
    y = jax.random.normal(k2, (2, 4, 16, 16), dtype=jnp.float32)
    out = jax.block_until_ready(reluloss(x, y))
    ref = jnp.maximum(x - y, 0.0)
    assert out.shape == x.shape and out.dtype == x.dtype
    assert jnp.allclose(out, ref, atol=1e-6), "mismatch vs small-shape reference"

    # 2) Broadcast + non-128-divisible shape (fallback path).
    a = jax.random.normal(k1, (3, 5, 7), dtype=jnp.float32)
    b = jax.random.normal(k2, (1, 5, 7), dtype=jnp.float32)
    out2 = jax.block_until_ready(reluloss(a, b))
    ref2 = jnp.maximum(a - b, 0.0)
    assert out2.shape == ref2.shape
    assert jnp.allclose(out2, ref2, atol=1e-6), "mismatch vs broadcast reference"

    # 3) Larger same-shape f32 pair -> exercises the Pallas tiled kernel.
    xl = jax.random.normal(k1, (512, 2048), dtype=jnp.float32)
    yl = jax.random.normal(k2, (512, 2048), dtype=jnp.float32)
    out3 = jax.block_until_ready(reluloss(xl, yl))
    ref3 = jnp.maximum(xl - yl, 0.0)
    assert out3.shape == ref3.shape and out3.dtype == ref3.dtype
    assert jnp.allclose(out3, ref3, atol=1e-6), "mismatch vs Pallas f32 reference"

    # 4) Scalar target -> exercises the in-kernel broadcast path (no HBM blow-up).
    xs = jax.random.normal(k1, (256, 4096), dtype=jnp.float32)
    ts = jnp.float32(0.1)
    out4 = jax.block_until_ready(reluloss(xs, ts))
    ref4 = jnp.maximum(xs - ts, 0.0)
    assert jnp.allclose(out4, ref4, atol=1e-6), "mismatch vs scalar-target reference"

    # 5) bf16 same-shape pair -> exercises the 16-sublane block rounding.
    xb = jax.random.normal(k1, (512, 2048), dtype=jnp.bfloat16)
    yb = jax.random.normal(k2, (512, 2048), dtype=jnp.bfloat16)
    out5 = jax.block_until_ready(reluloss(xb, yb))
    ref5 = jnp.maximum(xb - yb, 0)
    assert out5.dtype == jnp.bfloat16
    assert jnp.allclose(out5.astype(jnp.float32), ref5.astype(jnp.float32),
                        atol=1e-2, rtol=1e-2), "mismatch vs Pallas bf16 reference"

    print("KERNEL_OK")
</pallas_src>

<mosaic_0001>
module attributes {stable_mosaic.version = 11 : i64} {
  func.func @_reluloss_kernel(%arg0: i32, %arg1: memref<64x4096xf32, #tpu.memory_space<vmem>>, %arg2: memref<64x4096xf32, #tpu.memory_space<vmem>>, %arg3: memref<64x4096xf32, #tpu.memory_space<vmem>>) attributes {dimension_semantics = [#tpu.dimension_semantics<parallel>], iteration_bounds = array<i64: 4>, scalar_prefetch = 0 : i64, scratch_operands = 0 : i64, tpu.core_type = #tpu.core_type<tc>, window_params = [{transform_indices = @transform_0, window_bounds = array<i64: 64, 4096>}, {transform_indices = @transform_1, window_bounds = array<i64: 64, 4096>}, {transform_indices = @transform_2, window_bounds = array<i64: 64, 4096>}]} {
    %c0 = arith.constant 0 : index
    %c0_0 = arith.constant 0 : index
    %0 = vector.load %arg1[%c0, %c0_0] : memref<64x4096xf32, #tpu.memory_space<vmem>>, vector<64x4096xf32>
    %c0_1 = arith.constant 0 : index
    %c0_2 = arith.constant 0 : index
    %1 = vector.load %arg2[%c0_1, %c0_2] : memref<64x4096xf32, #tpu.memory_space<vmem>>, vector<64x4096xf32>
    %2 = arith.subf %0, %1 : vector<64x4096xf32>
    %cst = arith.constant 0.000000e+00 : f32
    %3 = vector.broadcast %cst : f32 to vector<64x4096xf32>
    %4 = arith.maximumf %2, %3 : vector<64x4096xf32>
    %c0_3 = arith.constant 0 : index
    %c0_4 = arith.constant 0 : index
    %5 = vector.load %arg3[%c0_3, %c0_4] : memref<64x4096xf32, #tpu.memory_space<vmem>>, vector<64x4096xf32>
    tpu.vector_store %arg3[%c0_3, %c0_4], %4 {strides = array<i32>} : memref<64x4096xf32, #tpu.memory_space<vmem>>, vector<64x4096xf32>,
    return
  }
  func.func @transform_0(%arg0: i32) -> (i32, i32) {
    %c0_i32 = arith.constant 0 : i32
    %c0_i32_0 = arith.constant 0 : i32
    return %arg0, %c0_i32 : i32, i32
  }
  func.func @transform_1(%arg0: i32) -> (i32, i32) {
    %c0_i32 = arith.constant 0 : i32
    %c0_i32_0 = arith.constant 0 : i32
    return %arg0, %c0_i32 : i32, i32
  }
  func.func @transform_2(%arg0: i32) -> (i32, i32) {
    %c0_i32 = arith.constant 0 : i32
    %c0_i32_0 = arith.constant 0 : i32
    return %arg0, %c0_i32 : i32, i32
  }
}

</mosaic_0001>

<llo_original>
// kernel: tpu_custom_call.1
$region0: #{tpu_custom_call.1}
  #allocation0 [shape = 'u32[]', space=smem, size = 0x4, offset = 0x4, fixed_abs, tag = 'smem constant byte address 0x4 - core index']
  #allocation1 [shape = 'u32[144,128]{1,0:T(1,128)}', space=vmem, size = 0x12000, scoped, tag = 'internal scratch']
  %s0 = inlined_call_operand.hbm [shape: f32[256,4096], index: 0, kind: input, shape index: {}]
  %s1 = inlined_call_operand.hbm [shape: f32[256,4096], index: 1, kind: input, shape index: {}]
  %s2 = inlined_call_operand.hbm [shape: f32[256,4096], index: 2, kind: output, shape index: {}]
  %s3 = sld [smem:[#allocation0]]
  $region49: #{tpu_custom_call.1} parent=0
    _
  %s5 = ssub.s32 1, %s3
  %s6 = scalar_select 0, %s5, %s3
  $region1: #{tpu_custom_call.1} parent=0
    #allocation2 [shape = 'u8[2097152]{0}', space=vmem, size = 0x200000, scoped, tag = 'input window, operand 0']
    #allocation3 [shape = 's32[2]{0}', space=sflag, size = 0x8, scoped, tag = 'scoped memory for tpu_custom_call.1']
    #allocation4 [shape = 's32[2]{0}', space=sflag, size = 0x8, scoped, tag = 'scoped memory for tpu_custom_call.1']
    #allocation5 [shape = 'u8[2097152]{0}', space=vmem, size = 0x200000, scoped, tag = 'input window, operand 1']
    #allocation6 [shape = 's32[2]{0}', space=sflag, size = 0x8, scoped, tag = 'scoped memory for tpu_custom_call.1']
    #allocation7 [shape = 'u8[2097152]{0}', space=vmem, size = 0x200000, scoped, tag = 'output window, operand 0']
    %7 = vsyncpa [#allocation3], 0
    %s8 = scalar_lea.sflag [#allocation3], 1
    %9 = vsyncpa %s8, 0
    %10 = vsyncpa [#allocation6], 0
    %s11 = scalar_lea.sflag [#allocation6], 1
    %12 = vsyncpa %s11, 0
    %13 = vsyncpa [#allocation4], 0
    %s14 = scalar_lea.sflag [#allocation4], 1
    %15 = vsyncpa %s14, 0
    loop: start=0, step=1, limit=6
    $region2: #{tpu_custom_call.1} parent=1 // loop_pre_header
      _
    $region3: #{tpu_custom_call.1} parent=1 // loop_header
      %s17 = sphi 0, %s21
      %p18 = scmp.ge.s32.totalorder %s17, 6
      %s27 = sphi 0, %s29
      %s30 = sphi 0, %s27
      %s31 = sphi 0, %s30
      %s47 = sphi 0, %s31
      %s53 = sphi 0, %s55
      %s56 = sphi 0, %s53
      %s57 = sphi 0, %s56
      %s73 = sphi 0, %s57
      %s79 = sphi 0, %s81
      %s82 = sphi 0, %s79
      %s83 = sphi 0, %s82
      %s99 = sphi 0, %s83
    $region4: #{tpu_custom_call.1} parent=1 // loop_header_branch
      %20 = sbr.rel (%p18) target = $region8
    $region5: #{tpu_custom_call.1} parent=1 // loop_body
      %s22 = ssub.s32 %s17, 1
      %s23 = ssub.s32 %s17, 2
      %s24 = sadd.s32 %s17, 1
      %s25 = ssub.s32 %s17, %s24
      %p26 = scmp.eq.s32.totalorder %s25, 0
      %s28 = sadd.s32 %s27, 1
      %s29 = scalar_select %p26, %s27, %s28
      %p32 = pneg %p26
      %p33 = scmp.eq.s32.totalorder %s17, 3
      %p34 = por %p32, %p33
      %p35 = scmp.ne.s32.totalorder %s27, %s30
      %p36 = scmp.eq.s32.totalorder %s17, 0
      %p37 = por %p35, %p36
      %p38 = scmp.ne.s32.totalorder %s27, %s30
      %p39 = scmp.eq.s32.totalorder %s22, 3
      %p40 = por %p38, %p39
      %p41 = scmp.ne.s32.totalorder %s30, %s31
      %p42 = scmp.eq.s32.totalorder %s22, 0
      %p43 = por %p41, %p42
      %p44 = scmp.ne.s32.totalorder %s30, %s31
      %p45 = scmp.eq.s32.totalorder %s23, 3
      %p46 = por %p44, %p45
      %p48 = scmp.ne.s32.totalorder %s31, %s47
      %p49 = scmp.eq.s32.totalorder %s23, 0
      %p50 = por %p48, %p49
      %s51 = ssub.s32 %s17, %s24
      %p52 = scmp.eq.s32.totalorder %s51, 0
      %s54 = sadd.s32 %s53, 1
      %s55 = scalar_select %p52, %s53, %s54
      %p58 = pneg %p52
      %p59 = scmp.eq.s32.totalorder %s17, 3
      %p60 = por %p58, %p59
      %p61 = scmp.ne.s32.totalorder %s53, %s56
      %p62 = scmp.eq.s32.totalorder %s17, 0
      %p63 = por %p61, %p62
      %p64 = scmp.ne.s32.totalorder %s53, %s56
      %p65 = scmp.eq.s32.totalorder %s22, 3
      %p66 = por %p64, %p65
      %p67 = scmp.ne.s32.totalorder %s56, %s57
      %p68 = scmp.eq.s32.totalorder %s22, 0
      %p69 = por %p67, %p68
      %p70 = scmp.ne.s32.totalorder %s56, %s57
      %p71 = scmp.eq.s32.totalorder %s23, 3
      %p72 = por %p70, %p71
      %p74 = scmp.ne.s32.totalorder %s57, %s73
      %p75 = scmp.eq.s32.totalorder %s23, 0
      %p76 = por %p74, %p75
      %s77 = ssub.s32 %s17, %s24
      %p78 = scmp.eq.s32.totalorder %s77, 0
      %s80 = sadd.s32 %s79, 1
      %s81 = scalar_select %p78, %s79, %s80
      %p84 = pneg %p78
      %p85 = scmp.eq.s32.totalorder %s17, 3
      %p86 = por %p84, %p85
      %p87 = scmp.ne.s32.totalorder %s79, %s82
      %p88 = scmp.eq.s32.totalorder %s17, 0
      %p89 = por %p87, %p88
      %p90 = scmp.ne.s32.totalorder %s79, %s82
      %p91 = scmp.eq.s32.totalorder %s22, 3
      %p92 = por %p90, %p91
      %p93 = scmp.ne.s32.totalorder %s82, %s83
      %p94 = scmp.eq.s32.totalorder %s22, 0
      %p95 = por %p93, %p94
      %p96 = scmp.ne.s32.totalorder %s82, %s83
      %p97 = scmp.eq.s32.totalorder %s23, 3
      %p98 = por %p96, %p97
      %p100 = scmp.ne.s32.totalorder %s83, %s99
      %p101 = scmp.eq.s32.totalorder %s23, 0
      %p102 = por %p100, %p101
      %p103 = scmp.le.s32.totalorder 1, %s17
      %p104 = scmp.lt.s32.totalorder %s17, 5
      %p105 = pnand %p103, %p104
      %p106 = pneg %p105
      // Predicated region
      $region9: #{tpu_custom_call.1} parent=5 // pred_check
        _
      $region10: #{tpu_custom_call.1} parent=5 // pred_check_branch
        %108 = sbr.rel (%p105) target = $region12
      $region11: #{tpu_custom_call.1} parent=5 // pred_region
        %s109 = ssub.s32 %s17, 1
      $region12: #{tpu_custom_call.1} parent=5 // pred_fallthru
        _
      %p110 = scmp.lt.s32.totalorder %s17, 4
      // Predicated region
      $region13: #{tpu_custom_call.1} parent=5 // pred_check
        %p111 = pneg %p110
      $region14: #{tpu_custom_call.1} parent=5 // pred_check_branch
        %113 = sbr.rel (%p111) target = $region16
      $region15: #{tpu_custom_call.1} parent=5 // pred_region
        // Predicated region
        $region17: #{tpu_custom_call.1} parent=15 // pred_check
          %p114 = pneg %p37
        $region18: #{tpu_custom_call.1} parent=15 // pred_check_branch
          %116 = sbr.rel (%p114) target = $region20
        $region19: #{tpu_custom_call.1} parent=15 // pred_region
          %s117 = sand.u32 %s27, 1
          %s118 = scalar_lea.sflag [#allocation3], %s117
          %s119 = sand.u32 %s27, 1
          %s120 = smul.addr %s119, 2048
          %s121 = scalar_lea.vmem [#allocation2], %s120
          %s122 = smul.u32 8, %s17
          %s124 = ssub.s32 32768, 32768
          %125 = vsyncadd %s118, %s124
          %s126 = smul.addr %s122, 32
          %s127 = smul.addr %s126, 128
          %s128 = scalar_lea.hbm %s0, %s127
          %s129 = sshll.u32 %s121, 4
          %s130 = int_to_ptr.vmem [resolvable:$true] %s129
          %135 = dma.hbm_to_vmem [thread:$0]  %s128, 32768, %s130, %s118, 4096, 4096, 256
        $region20: #{tpu_custom_call.1} parent=15 // pred_fallthru
          _
        // Predicated region
        $region21: #{tpu_custom_call.1} parent=15 // pred_check
          %p136 = pneg %p63
        $region22: #{tpu_custom_call.1} parent=15 // pred_check_branch
          %138 = sbr.rel (%p136) target = $region24
        $region23: #{tpu_custom_call.1} parent=15 // pred_region
          %s139 = sand.u32 %s53, 1
          %s140 = scalar_lea.sflag [#allocation6], %s139
          %s141 = sand.u32 %s53, 1
          %s142 = smul.addr %s141, 2048
          %s143 = scalar_lea.vmem [#allocation5], %s142
          %s144 = smul.u32 8, %s17
          %s146 = ssub.s32 32768, 32768
          %147 = vsyncadd %s140, %s146
          %s148 = smul.addr %s144, 32
          %s149 = smul.addr %s148, 128
          %s150 = scalar_lea.hbm %s1, %s149
          %s151 = sshll.u32 %s143, 4
          %s152 = int_to_ptr.vmem [resolvable:$true] %s151
          %157 = dma.hbm_to_vmem [thread:$0]  %s150, 32768, %s152, %s140, 4096, 4096, 256
        $region24: #{tpu_custom_call.1} parent=15 // pred_fallthru
          _
      $region16: #{tpu_custom_call.1} parent=5 // pred_fallthru
        _
      %p158 = scmp.le.s32.totalorder 1, %s17
      %p159 = scmp.lt.s32.totalorder %s17, 5
      %p160 = pnand %p158, %p159
      %p161 = pneg %p160
      // Predicated region
      $region25: #{tpu_custom_call.1} parent=5 // pred_check
        _
      $region26: #{tpu_custom_call.1} parent=5 // pred_check_branch
        %163 = sbr.rel (%p160) target = $region28
      $region27: #{tpu_custom_call.1} parent=5 // pred_region
        %s164 = ssub.s32 %s17, 1
        %s165 = sand.u32 %s30, 1
        %s166 = scalar_lea.sflag [#allocation3], %s165
        %s167 = sand.u32 %s30, 1
        %s168 = smul.addr %s167, 2048
        %s169 = scalar_lea.vmem [#allocation2], %s168
        // Predicated region
        $region29: #{tpu_custom_call.1} parent=27 // pred_check
          %p170 = pneg %p43
        $region30: #{tpu_custom_call.1} parent=27 // pred_check_branch
          %172 = sbr.rel (%p170) target = $region32
        $region31: #{tpu_custom_call.1} parent=27 // pred_region
          %173 = dma.done %s166, 32768
        $region32: #{tpu_custom_call.1} parent=27 // pred_fallthru
          _
        %s174 = sand.u32 %s56, 1
        %s175 = scalar_lea.sflag [#allocation6], %s174
        %s176 = sand.u32 %s56, 1
        %s177 = smul.addr %s176, 2048
        %s178 = scalar_lea.vmem [#allocation5], %s177
        // Predicated region
        $region33: #{tpu_custom_call.1} parent=27 // pred_check
          %p179 = pneg %p69
        $region34: #{tpu_custom_call.1} parent=27 // pred_check_branch
          %181 = sbr.rel (%p179) target = $region36
        $region35: #{tpu_custom_call.1} parent=27 // pred_region
          %182 = dma.done %s175, 32768
        $region36: #{tpu_custom_call.1} parent=27 // pred_fallthru
          _
        %s183 = sand.u32 %s30, 1
        %s184 = scalar_lea.sflag [#allocation3], %s183
        %s185 = sand.u32 %s30, 1
        %s186 = smul.addr %s185, 2048
        %s187 = scalar_lea.vmem [#allocation2], %s186
        %p188 = pneg %p43
        %p189 = pneg %p40
        %s190 = sand.u32 %s56, 1
        %s191 = scalar_lea.sflag [#allocation6], %s190
        %s192 = sand.u32 %s56, 1
        %s193 = smul.addr %s192, 2048
        %s194 = scalar_lea.vmem [#allocation5], %s193
        %p195 = pneg %p69
        %p196 = pneg %p66
        %p197 = pneg %p95
        %p198 = pneg %p92
        %s199 = sand.u32 %s82, 1
        %s200 = scalar_lea.sflag [#allocation4], %s199
        %s201 = sand.u32 %s82, 1
        %s202 = smul.addr %s201, 2048
        %s203 = scalar_lea.vmem [#allocation7], %s202
        %s204 = smul.u32 8, %s22
        %s205 = smul.u32 8, %s22
        %s206 = smul.u32 8, %s22
        %v207 = vld [vmem:[%s169] sm:$0xff]
        %v208 = vld [vmem:[%s169 + $0x8] sm:$0xff]
        %v209 = vld [vmem:[%s169 + $0x10] sm:$0xff]
        %v210 = vld [vmem:[%s169 + $0x18] sm:$0xff]
        %v211 = vld [vmem:[%s169 + $0x20] sm:$0xff]
        %v212 = vld [vmem:[%s169 + $0x28] sm:$0xff]
        %v213 = vld [vmem:[%s169 + $0x30] sm:$0xff]
        %v214 = vld [vmem:[%s169 + $0x38] sm:$0xff]
        %v215 = vld [vmem:[%s169 + $0x40] sm:$0xff]
        %v216 = vld [vmem:[%s169 + $0x48] sm:$0xff]
        %v217 = vld [vmem:[%s169 + $0x50] sm:$0xff]
        %v218 = vld [vmem:[%s169 + $0x58] sm:$0xff]
        %v219 = vld [vmem:[%s169 + $0x60] sm:$0xff]
        %v220 = vld [vmem:[%s169 + $0x68] sm:$0xff]
        %v221 = vld [vmem:[%s169 + $0x70] sm:$0xff]
        %v222 = vld [vmem:[%s169 + $0x78] sm:$0xff]
        %v223 = vld [vmem:[%s169 + $0x80] sm:$0xff]
        %v224 = vld [vmem:[%s169 + $0x88] sm:$0xff]
        %v225 = vld [vmem:[%s169 + $0x90] sm:$0xff]
        %v226 = vld [vmem:[%s169 + $0x98] sm:$0xff]
        %v227 = vld [vmem:[%s169 + $0xa0] sm:$0xff]
        %v228 = vld [vmem:[%s169 + $0xa8] sm:$0xff]
        %v229 = vld [vmem:[%s169 + $0xb0] sm:$0xff]
        %v230 = vld [vmem:[%s169 + $0xb8] sm:$0xff]
        %v231 = vld [vmem:[%s169 + $0xc0] sm:$0xff]
        %v232 = vld [vmem:[%s169 + $0xc8] sm:$0xff]
        %v233 = vld [vmem:[%s169 + $0xd0] sm:$0xff]
        %v234 = vld [vmem:[%s169 + $0xd8] sm:$0xff]
        %v235 = vld [vmem:[%s169 + $0xe0] sm:$0xff]
        %v236 = vld [vmem:[%s169 + $0xe8] sm:$0xff]
        %v237 = vld [vmem:[%s169 + $0xf0] sm:$0xff]
        %v238 = vld [vmem:[%s169 + $0xf8] sm:$0xff]
        %v239 = vld [vmem:[%s169 + $0x100] sm:$0xff]
        %v240 = vld [vmem:[%s169 + $0x108] sm:$0xff]
        %v241 = vld [vmem:[%s169 + $0x110] sm:$0xff]
        %v242 = vld [vmem:[%s169 + $0x118] sm:$0xff]
        %v243 = vld [vmem:[%s169 + $0x120] sm:$0xff]
        %v244 = vld [vmem:[%s169 + $0x128] sm:$0xff]
        %v245 = vld [vmem:[%s169 + $0x130] sm:$0xff]
        %v246 = vld [vmem:[%s169 + $0x138] sm:$0xff]
        %v247 = vld [vmem:[%s169 + $0x140] sm:$0xff]
        %v248 = vld [vmem:[%s169 + $0x148] sm:$0xff]
        %v249 = vld [vmem:[%s169 + $0x150] sm:$0xff]
        %v250 = vld [vmem:[%s169 + $0x158] sm:$0xff]
        %v251 = vld [vmem:[%s169 + $0x160] sm:$0xff]
        %v252 = vld [vmem:[%s169 + $0x168] sm:$0xff]
        %v253 = vld [vmem:[%s169 + $0x170] sm:$0xff]
        %v254 = vld [vmem:[%s169 + $0x178] sm:$0xff]
        %v255 = vld [vmem:[%s169 + $0x180] sm:$0xff]
        %v256 = vld [vmem:[%s169 + $0x188] sm:$0xff]
        %v257 = vld [vmem:[%s169 + $0x190] sm:$0xff]
        %v258 = vld [vmem:[%s169 + $0x198] sm:$0xff]
        %v259 = vld [vmem:[%s169 + $0x1a0] sm:$0xff]
        %v260 = vld [vmem:[%s169 + $0x1a8] sm:$0xff]
        %v261 = vld [vmem:[%s169 + $0x1b0] sm:$0xff]
        %v262 = vld [vmem:[%s169 + $0x1b8] sm:$0xff]
        %v263 = vld [vmem:[%s169 + $0x1c0] sm:$0xff]
        %v264 = vld [vmem:[%s169 + $0x1c8] sm:$0xff]
        %v265 = vld [vmem:[%s169 + $0x1d0] sm:$0xff]
        %v266 = vld [vmem:[%s169 + $0x1d8] sm:$0xff]
        %v267 = vld [vmem:[%s169 + $0x1e0] sm:$0xff]
        %v268 = vld [vmem:[%s169 + $0x1e8] sm:$0xff]
        %v269 = vld [vmem:[%s169 + $0x1f0] sm:$0xff]
        %v270 = vld [vmem:[%s169 + $0x1f8] sm:$0xff]
        %v271 = vld [vmem:[%s169 + $0x200] sm:$0xff]
        %v272 = vld [vmem:[%s169 + $0x208] sm:$0xff]
        %v273 = vld [vmem:[%s169 + $0x210] sm:$0xff]
        %v274 = vld [vmem:[%s169 + $0x218] sm:$0xff]
        %v275 = vld [vmem:[%s169 + $0x220] sm:$0xff]
        %v276 = vld [vmem:[%s169 + $0x228] sm:$0xff]
        %v277 = vld [vmem:[%s169 + $0x230] sm:$0xff]
        %v278 = vld [vmem:[%s169 + $0x238] sm:$0xff]
        %v279 = vld [vmem:[%s169 + $0x240] sm:$0xff]
        %v280 = vld [vmem:[%s169 + $0x248] sm:$0xff]
        %v281 = vld [vmem:[%s169 + $0x250] sm:$0xff]
        %v282 = vld [vmem:[%s169 + $0x258] sm:$0xff]
        %v283 = vld [vmem:[%s169 + $0x260] sm:$0xff]
        %v284 = vld [vmem:[%s169 + $0x268] sm:$0xff]
        %v285 = vld [vmem:[%s169 + $0x270] sm:$0xff]
        %v286 = vld [vmem:[%s169 + $0x278] sm:$0xff]
        %v287 = vld [vmem:[%s169 + $0x280] sm:$0xff]
        %v288 = vld [vmem:[%s169 + $0x288] sm:$0xff]
        %v289 = vld [vmem:[%s169 + $0x290] sm:$0xff]
        %v290 = vld [vmem:[%s169 + $0x298] sm:$0xff]
        %v291 = vld [vmem:[%s169 + $0x2a0] sm:$0xff]
        %v292 = vld [vmem:[%s169 + $0x2a8] sm:$0xff]
        %v293 = vld [vmem:[%s169 + $0x2b0] sm:$0xff]
        %v294 = vld [vmem:[%s169 + $0x2b8] sm:$0xff]
        %v295 = vld [vmem:[%s169 + $0x2c0] sm:$0xff]
        %v296 = vld [vmem:[%s169 + $0x2c8] sm:$0xff]
        %v297 = vld [vmem:[%s169 + $0x2d0] sm:$0xff]
        %v298 = vld [vmem:[%s169 + $0x2d8] sm:$0xff]
        %v299 = vld [vmem:[%s169 + $0x2e0] sm:$0xff]
        %v300 = vld [vmem:[%s169 + $0x2e8] sm:$0xff]
        %v301 = vld [vmem:[%s169 + $0x2f0] sm:$0xff]
        %v302 = vld [vmem:[%s169 + $0x2f8] sm:$0xff]
        %v303 = vld [vmem:[%s169 + $0x300] sm:$0xff]
        %v304 = vld [vmem:[%s169 + $0x308] sm:$0xff]
        %v305 = vld [vmem:[%s169 + $0x310] sm:$0xff]
        %v306 = vld [vmem:[%s169 + $0x318] sm:$0xff]
        %v307 = vld [vmem:[%s169 + $0x320] sm:$0xff]
        %v308 = vld [vmem:[%s169 + $0x328] sm:$0xff]
        %v309 = vld [vmem:[%s169 + $0x330] sm:$0xff]
        %v310 = vld [vmem:[%s169 + $0x338] sm:$0xff]
        %v311 = vld [vmem:[%s169 + $0x340] sm:$0xff]
        %v312 = vld [vmem:[%s169 + $0x348] sm:$0xff]
        %v313 = vld [vmem:[%s169 + $0x350] sm:$0xff]
        %v314 = vld [vmem:[%s169 + $0x358] sm:$0xff]
        %v315 = vld [vmem:[%s169 + $0x360] sm:$0xff]
        %v316 = vld [vmem:[%s169 + $0x368] sm:$0xff]
        %v317 = vld [vmem:[%s169 + $0x370] sm:$0xff]
        %v318 = vld [vmem:[%s169 + $0x378] sm:$0xff]
        %v319 = vld [vmem:[%s169 + $0x380] sm:$0xff]
        %v320 = vld [vmem:[%s169 + $0x388] sm:$0xff]
        %v321 = vld [vmem:[%s169 + $0x390] sm:$0xff]
        %v322 = vld [vmem:[%s169 + $0x398] sm:$0xff]
        %v323 = vld [vmem:[%s169 + $0x3a0] sm:$0xff]
        %v324 = vld [vmem:[%s169 + $0x3a8] sm:$0xff]
        %v325 = vld [vmem:[%s169 + $0x3b0] sm:$0xff]
        %v326 = vld [vmem:[%s169 + $0x3b8] sm:$0xff]
        %v327 = vld [vmem:[%s169 + $0x3c0] sm:$0xff]
        %v328 = vld [vmem:[%s169 + $0x3c8] sm:$0xff]
        %v329 = vld [vmem:[%s169 + $0x3d0] sm:$0xff]
        %v330 = vld [vmem:[%s169 + $0x3d8] sm:$0xff]
        %v331 = vld [vmem:[%s169 + $0x3e0] sm:$0xff]
        %v332 = vld [vmem:[%s169 + $0x3e8] sm:$0xff]
        %v333 = vld [vmem:[%s169 + $0x3f0] sm:$0xff]
        %v334 = vld [vmem:[%s169 + $0x3f8] sm:$0xff]
        %v335 = vld [vmem:[%s169 + $0x400] sm:$0xff]
        %v336 = vld [vmem:[%s169 + $0x408] sm:$0xff]
        %v337 = vld [vmem:[%s169 + $0x410] sm:$0xff]
        %v338 = vld [vmem:[%s169 + $0x418] sm:$0xff]
        %v339 = vld [vmem:[%s169 + $0x420] sm:$0xff]
        %v340 = vld [vmem:[%s169 + $0x428] sm:$0xff]
        %v341 = vld [vmem:[%s169 + $0x430] sm:$0xff]
        %v342 = vld [vmem:[%s169 + $0x438] sm:$0xff]
        %v343 = vld [vmem:[%s169 + $0x440] sm:$0xff]
        %v344 = vld [vmem:[%s169 + $0x448] sm:$0xff]
        %v345 = vld [vmem:[%s169 + $0x450] sm:$0xff]
        %v346 = vld [vmem:[%s169 + $0x458] sm:$0xff]
        %v347 = vld [vmem:[%s169 + $0x460] sm:$0xff]
        %v348 = vld [vmem:[%s169 + $0x468] sm:$0xff]
        %v349 = vld [vmem:[%s169 + $0x470] sm:$0xff]
        %v350 = vld [vmem:[%s169 + $0x478] sm:$0xff]
        %v351 = vld [vmem:[%s169 + $0x480] sm:$0xff]
        %v352 = vld [vmem:[%s169 + $0x488] sm:$0xff]
        %v353 = vld [vmem:[%s169 + $0x490] sm:$0xff]
        %v354 = vld [vmem:[%s169 + $0x498] sm:$0xff]
        %v355 = vld [vmem:[%s169 + $0x4a0] sm:$0xff]
        %v356 = vld [vmem:[%s169 + $0x4a8] sm:$0xff]
        %v357 = vld [vmem:[%s169 + $0x4b0] sm:$0xff]
        %v358 = vld [vmem:[%s169 + $0x4b8] sm:$0xff]
        %v359 = vld [vmem:[%s169 + $0x4c0] sm:$0xff]
        %v360 = vld [vmem:[%s169 + $0x4c8] sm:$0xff]
        %v361 = vld [vmem:[%s169 + $0x4d0] sm:$0xff]
        %v362 = vld [vmem:[%s169 + $0x4d8] sm:$0xff]
        %v363 = vld [vmem:[%s169 + $0x4e0] sm:$0xff]
        %v364 = vld [vmem:[%s169 + $0x4e8] sm:$0xff]
        %v365 = vld [vmem:[%s169 + $0x4f0] sm:$0xff]
        %v366 = vld [vmem:[%s169 + $0x4f8] sm:$0xff]
        %v367 = vld [vmem:[%s169 + $0x500] sm:$0xff]
        %v368 = vld [vmem:[%s169 + $0x508] sm:$0xff]
        %v369 = vld [vmem:[%s169 + $0x510] sm:$0xff]
        %v370 = vld [vmem:[%s169 + $0x518] sm:$0xff]
        %v371 = vld [vmem:[%s169 + $0x520] sm:$0xff]
        %v372 = vld [vmem:[%s169 + $0x528] sm:$0xff]
        %v373 = vld [vmem:[%s169 + $0x530] sm:$0xff]
        %v374 = vld [vmem:[%s169 + $0x538] sm:$0xff]
        %v375 = vld [vmem:[%s169 + $0x540] sm:$0xff]
        %v376 = vld [vmem:[%s169 + $0x548] sm:$0xff]
        %v377 = vld [vmem:[%s169 + $0x550] sm:$0xff]
        %v378 = vld [vmem:[%s169 + $0x558] sm:$0xff]
        %v379 = vld [vmem:[%s169 + $0x560] sm:$0xff]
        %v380 = vld [vmem:[%s169 + $0x568] sm:$0xff]
        %v381 = vld [vmem:[%s169 + $0x570] sm:$0xff]
        %v382 = vld [vmem:[%s169 + $0x578] sm:$0xff]
        %v383 = vld [vmem:[%s169 + $0x580] sm:$0xff]
        %v384 = vld [vmem:[%s169 + $0x588] sm:$0xff]
        %v385 = vld [vmem:[%s169 + $0x590] sm:$0xff]
        %v386 = vld [vmem:[%s169 + $0x598] sm:$0xff]
        %v387 = vld [vmem:[%s169 + $0x5a0] sm:$0xff]
        %v388 = vld [vmem:[%s169 + $0x5a8] sm:$0xff]
        %v389 = vld [vmem:[%s169 + $0x5b0] sm:$0xff]
        %v390 = vld [vmem:[%s169 + $0x5b8] sm:$0xff]
        %v391 = vld [vmem:[%s169 + $0x5c0] sm:$0xff]
        %v392 = vld [vmem:[%s169 + $0x5c8] sm:$0xff]
        %v393 = vld [vmem:[%s169 + $0x5d0] sm:$0xff]
        %v394 = vld [vmem:[%s169 + $0x5d8] sm:$0xff]
        %v395 = vld [vmem:[%s169 + $0x5e0] sm:$0xff]
        %v396 = vld [vmem:[%s169 + $0x5e8] sm:$0xff]
        %v397 = vld [vmem:[%s169 + $0x5f0] sm:$0xff]
        %v398 = vld [vmem:[%s169 + $0x5f8] sm:$0xff]
        %v399 = vld [vmem:[%s169 + $0x600] sm:$0xff]
        %v400 = vld [vmem:[%s169 + $0x608] sm:$0xff]
        %v401 = vld [vmem:[%s169 + $0x610] sm:$0xff]
        %v402 = vld [vmem:[%s169 + $0x618] sm:$0xff]
        %v403 = vld [vmem:[%s169 + $0x620] sm:$0xff]
        %v404 = vld [vmem:[%s169 + $0x628] sm:$0xff]
        %v405 = vld [vmem:[%s169 + $0x630] sm:$0xff]
        %v406 = vld [vmem:[%s169 + $0x638] sm:$0xff]
        %v407 = vld [vmem:[%s169 + $0x640] sm:$0xff]
        %v408 = vld [vmem:[%s169 + $0x648] sm:$0xff]
        %v409 = vld [vmem:[%s169 + $0x650] sm:$0xff]
        %v410 = vld [vmem:[%s169 + $0x658] sm:$0xff]
        %v411 = vld [vmem:[%s169 + $0x660] sm:$0xff]
        %v412 = vld [vmem:[%s169 + $0x668] sm:$0xff]
        %v413 = vld [vmem:[%s169 + $0x670] sm:$0xff]
        %v414 = vld [vmem:[%s169 + $0x678] sm:$0xff]
        %v415 = vld [vmem:[%s169 + $0x680] sm:$0xff]
        %v416 = vld [vmem:[%s169 + $0x688] sm:$0xff]
        %v417 = vld [vmem:[%s169 + $0x690] sm:$0xff]
        %v418 = vld [vmem:[%s169 + $0x698] sm:$0xff]
        %v419 = vld [vmem:[%s169 + $0x6a0] sm:$0xff]
        %v420 = vld [vmem:[%s169 + $0x6a8] sm:$0xff]
        %v421 = vld [vmem:[%s169 + $0x6b0] sm:$0xff]
        %v422 = vld [vmem:[%s169 + $0x6b8] sm:$0xff]
        %v423 = vld [vmem:[%s169 + $0x6c0] sm:$0xff]
        %v424 = vld [vmem:[%s169 + $0x6c8] sm:$0xff]
        %v425 = vld [vmem:[%s169 + $0x6d0] sm:$0xff]
        %v426 = vld [vmem:[%s169 + $0x6d8] sm:$0xff]
        %v427 = vld [vmem:[%s169 + $0x6e0] sm:$0xff]
        %v428 = vld [vmem:[%s169 + $0x6e8] sm:$0xff]
        %v429 = vld [vmem:[%s169 + $0x6f0] sm:$0xff]
        %v430 = vld [vmem:[%s169 + $0x6f8] sm:$0xff]
        %v431 = vld [vmem:[%s169 + $0x700] sm:$0xff]
        %v432 = vld [vmem:[%s169 + $0x708] sm:$0xff]
        %v433 = vld [vmem:[%s169 + $0x710] sm:$0xff]
        %v434 = vld [vmem:[%s169 + $0x718] sm:$0xff]
        %v435 = vld [vmem:[%s169 + $0x720] sm:$0xff]
        %v436 = vld [vmem:[%s169 + $0x728] sm:$0xff]
        %v437 = vld [vmem:[%s169 + $0x730] sm:$0xff]
        %v438 = vld [vmem:[%s169 + $0x738] sm:$0xff]
        %v439 = vld [vmem:[%s169 + $0x740] sm:$0xff]
        %v440 = vld [vmem:[%s169 + $0x748] sm:$0xff]
        %v441 = vld [vmem:[%s169 + $0x750] sm:$0xff]
        %v442 = vld [vmem:[%s169 + $0x758] sm:$0xff]
        %v443 = vld [vmem:[%s169 + $0x760] sm:$0xff]
        %v444 = vld [vmem:[%s169 + $0x768] sm:$0xff]
        %v445 = vld [vmem:[%s169 + $0x770] sm:$0xff]
        %v446 = vld [vmem:[%s169 + $0x778] sm:$0xff]
        %v447 = vld [vmem:[%s169 + $0x780] sm:$0xff]
        %v448 = vld [vmem:[%s169 + $0x788] sm:$0xff]
        %v449 = vld [vmem:[%s169 + $0x790] sm:$0xff]
        %v450 = vld [vmem:[%s169 + $0x798] sm:$0xff]
        %v451 = vld [vmem:[%s169 + $0x7a0] sm:$0xff]
        %v452 = vld [vmem:[%s169 + $0x7a8] sm:$0xff]
        %v453 = vld [vmem:[%s169 + $0x7b0] sm:$0xff]
        %v454 = vld [vmem:[%s169 + $0x7b8] sm:$0xff]
        %v455 = vld [vmem:[%s169 + $0x7c0] sm:$0xff]
        %v456 = vld [vmem:[%s169 + $0x7c8] sm:$0xff]
        %v457 = vld [vmem:[%s169 + $0x7d0] sm:$0xff]
        %v458 = vld [vmem:[%s169 + $0x7d8] sm:$0xff]
        %v459 = vld [vmem:[%s169 + $0x7e0] sm:$0xff]
        %v460 = vld [vmem:[%s169 + $0x7e8] sm:$0xff]
        %v461 = vld [vmem:[%s169 + $0x7f0] sm:$0xff]
        %v462 = vld [vmem:[%s169 + $0x7f8] sm:$0xff]
        %v463 = vld [vmem:[%s178] sm:$0xff]
        %v464 = vld [vmem:[%s178 + $0x8] sm:$0xff]
        %v465 = vld [vmem:[%s178 + $0x10] sm:$0xff]
        %v466 = vld [vmem:[%s178 + $0x18] sm:$0xff]
        %v467 = vld [vmem:[%s178 + $0x20] sm:$0xff]
        %v468 = vld [vmem:[%s178 + $0x28] sm:$0xff]
        %v469 = vld [vmem:[%s178 + $0x30] sm:$0xff]
        %v470 = vld [vmem:[%s178 + $0x38] sm:$0xff]
        %v471 = vld [vmem:[%s178 + $0x40] sm:$0xff]
        %v472 = vld [vmem:[%s178 + $0x48] sm:$0xff]
        %v473 = vld [vmem:[%s178 + $0x50] sm:$0xff]
        %v474 = vld [vmem:[%s178 + $0x58] sm:$0xff]
        %v475 = vld [vmem:[%s178 + $0x60] sm:$0xff]
        %v476 = vld [vmem:[%s178 + $0x68] sm:$0xff]
        %v477 = vld [vmem:[%s178 + $0x70] sm:$0xff]
        %v478 = vld [vmem:[%s178 + $0x78] sm:$0xff]
        %v479 = vld [vmem:[%s178 + $0x80] sm:$0xff]
        %v480 = vld [vmem:[%s178 + $0x88] sm:$0xff]
        %v481 = vld [vmem:[%s178 + $0x90] sm:$0xff]
        %v482 = vld [vmem:[%s178 + $0x98] sm:$0xff]
        %v483 = vld [vmem:[%s178 + $0xa0] sm:$0xff]
        %v484 = vld [vmem:[%s178 + $0xa8] sm:$0xff]
        %v485 = vld [vmem:[%s178 + $0xb0] sm:$0xff]
        %v486 = vld [vmem:[%s178 + $0xb8] sm:$0xff]
        %v487 = vld [vmem:[%s178 + $0xc0] sm:$0xff]
        %v488 = vld [vmem:[%s178 + $0xc8] sm:$0xff]
        %v489 = vld [vmem:[%s178 + $0xd0] sm:$0xff]
        %v490 = vld [vmem:[%s178 + $0xd8] sm:$0xff]
        %v491 = vld [vmem:[%s178 + $0xe0] sm:$0xff]
        %v492 = vld [vmem:[%s178 + $0xe8] sm:$0xff]
        %v493 = vld [vmem:[%s178 + $0xf0] sm:$0xff]
        %v494 = vld [vmem:[%s178 + $0xf8] sm:$0xff]
        %v495 = vld [vmem:[%s178 + $0x100] sm:$0xff]
        %v496 = vld [vmem:[%s178 + $0x108] sm:$0xff]
        %v497 = vld [vmem:[%s178 + $0x110] sm:$0xff]
        %v498 = vld [vmem:[%s178 + $0x118] sm:$0xff]
        %v499 = vld [vmem:[%s178 + $0x120] sm:$0xff]
        %v500 = vld [vmem:[%s178 + $0x128] sm:$0xff]
        %v501 = vld [vmem:[%s178 + $0x130] sm:$0xff]
        %v502 = vld [vmem:[%s178 + $0x138] sm:$0xff]
        %v503 = vld [vmem:[%s178 + $0x140] sm:$0xff]
        %v504 = vld [vmem:[%s178 + $0x148] sm:$0xff]
        %v505 = vld [vmem:[%s178 + $0x150] sm:$0xff]
        %v506 = vld [vmem:[%s178 + $0x158] sm:$0xff]
        %v507 = vld [vmem:[%s178 + $0x160] sm:$0xff]
        %v508 = vld [vmem:[%s178 + $0x168] sm:$0xff]
        %v509 = vld [vmem:[%s178 + $0x170] sm:$0xff]
        %v510 = vld [vmem:[%s178 + $0x178] sm:$0xff]
        %v511 = vld [vmem:[%s178 + $0x180] sm:$0xff]
        %v512 = vld [vmem:[%s178 + $0x188] sm:$0xff]
        %v513 = vld [vmem:[%s178 + $0x190] sm:$0xff]
        %v514 = vld [vmem:[%s178 + $0x198] sm:$0xff]
        %v515 = vld [vmem:[%s178 + $0x1a0] sm:$0xff]
        %v516 = vld [vmem:[%s178 + $0x1a8] sm:$0xff]
        %v517 = vld [vmem:[%s178 + $0x1b0] sm:$0xff]
        %v518 = vld [vmem:[%s178 + $0x1b8] sm:$0xff]
        %v519 = vld [vmem:[%s178 + $0x1c0] sm:$0xff]
        %v520 = vld [vmem:[%s178 + $0x1c8] sm:$0xff]
        %v521 = vld [vmem:[%s178 + $0x1d0] sm:$0xff]
        %v522 = vld [vmem:[%s178 + $0x1d8] sm:$0xff]
        %v523 = vld [vmem:[%s178 + $0x1e0] sm:$0xff]
        %v524 = vld [vmem:[%s178 + $0x1e8] sm:$0xff]
        %v525 = vld [vmem:[%s178 + $0x1f0] sm:$0xff]
        %v526 = vld [vmem:[%s178 + $0x1f8] sm:$0xff]
        %v527 = vld [vmem:[%s178 + $0x200] sm:$0xff]
        %v528 = vld [vmem:[%s178 + $0x208] sm:$0xff]
        %v529 = vld [vmem:[%s178 + $0x210] sm:$0xff]
        %v530 = vld [vmem:[%s178 + $0x218] sm:$0xff]
        %v531 = vld [vmem:[%s178 + $0x220] sm:$0xff]
        %v532 = vld [vmem:[%s178 + $0x228] sm:$0xff]
        %v533 = vld [vmem:[%s178 + $0x230] sm:$0xff]
        %v534 = vld [vmem:[%s178 + $0x238] sm:$0xff]
        %v535 = vld [vmem:[%s178 + $0x240] sm:$0xff]
        %v536 = vld [vmem:[%s178 + $0x248] sm:$0xff]
        %v537 = vld [vmem:[%s178 + $0x250] sm:$0xff]
        %v538 = vld [vmem:[%s178 + $0x258] sm:$0xff]
        %v539 = vld [vmem:[%s178 + $0x260] sm:$0xff]
        %v540 = vld [vmem:[%s178 + $0x268] sm:$0xff]
        %v541 = vld [vmem:[%s178 + $0x270] sm:$0xff]
        %v542 = vld [vmem:[%s178 + $0x278] sm:$0xff]
        %v543 = vld [vmem:[%s178 + $0x280] sm:$0xff]
        %v544 = vld [vmem:[%s178 + $0x288] sm:$0xff]
        %v545 = vld [vmem:[%s178 + $0x290] sm:$0xff]
        %v546 = vld [vmem:[%s178 + $0x298] sm:$0xff]
        %v547 = vld [vmem:[%s178 + $0x2a0] sm:$0xff]
        %v548 = vld [vmem:[%s178 + $0x2a8] sm:$0xff]
        %v549 = vld [vmem:[%s178 + $0x2b0] sm:$0xff]
        %v550 = vld [vmem:[%s178 + $0x2b8] sm:$0xff]
        %v551 = vld [vmem:[%s178 + $0x2c0] sm:$0xff]
        %v552 = vld [vmem:[%s178 + $0x2c8] sm:$0xff]
        %v553 = vld [vmem:[%s178 + $0x2d0] sm:$0xff]
        %v554 = vld [vmem:[%s178 + $0x2d8] sm:$0xff]
        %v555 = vld [vmem:[%s178 + $0x2e0] sm:$0xff]
        %v556 = vld [vmem:[%s178 + $0x2e8] sm:$0xff]
        %v557 = vld [vmem:[%s178 + $0x2f0] sm:$0xff]
        %v558 = vld [vmem:[%s178 + $0x2f8] sm:$0xff]
        %v559 = vld [vmem:[%s178 + $0x300] sm:$0xff]
        %v560 = vld [vmem:[%s178 + $0x308] sm:$0xff]
        %v561 = vld [vmem:[%s178 + $0x310] sm:$0xff]
        %v562 = vld [vmem:[%s178 + $0x318] sm:$0xff]
        %v563 = vld [vmem:[%s178 + $0x320] sm:$0xff]
        %v564 = vld [vmem:[%s178 + $0x328] sm:$0xff]
        %v565 = vld [vmem:[%s178 + $0x330] sm:$0xff]
        %v566 = vld [vmem:[%s178 + $0x338] sm:$0xff]
        %v567 = vld [vmem:[%s178 + $0x340] sm:$0xff]
        %v568 = vld [vmem:[%s178 + $0x348] sm:$0xff]
        %v569 = vld [vmem:[%s178 + $0x350] sm:$0xff]
        %v570 = vld [vmem:[%s178 + $0x358] sm:$0xff]
        %v571 = vld [vmem:[%s178 + $0x360] sm:$0xff]
        %v572 = vld [vmem:[%s178 + $0x368] sm:$0xff]
        %v573 = vld [vmem:[%s178 + $0x370] sm:$0xff]
        %v574 = vld [vmem:[%s178 + $0x378] sm:$0xff]
        %v575 = vld [vmem:[%s178 + $0x380] sm:$0xff]
        %v576 = vld [vmem:[%s178 + $0x388] sm:$0xff]
        %v577 = vld [vmem:[%s178 + $0x390] sm:$0xff]
        %v578 = vld [vmem:[%s178 + $0x398] sm:$0xff]
        %v579 = vld [vmem:[%s178 + $0x3a0] sm:$0xff]
        %v580 = vld [vmem:[%s178 + $0x3a8] sm:$0xff]
        %v581 = vld [vmem:[%s178 + $0x3b0] sm:$0xff]
        %v582 = vld [vmem:[%s178 + $0x3b8] sm:$0xff]
        %v583 = vld [vmem:[%s178 + $0x3c0] sm:$0xff]
        %v584 = vld [vmem:[%s178 + $0x3c8] sm:$0xff]
        %v585 = vld [vmem:[%s178 + $0x3d0] sm:$0xff]
        %v586 = vld [vmem:[%s178 + $0x3d8] sm:$0xff]
        %v587 = vld [vmem:[%s178 + $0x3e0] sm:$0xff]
        %v588 = vld [vmem:[%s178 + $0x3e8] sm:$0xff]
        %v589 = vld [vmem:[%s178 + $0x3f0] sm:$0xff]
        %v590 = vld [vmem:[%s178 + $0x3f8] sm:$0xff]
        %v591 = vld [vmem:[%s178 + $0x400] sm:$0xff]
        %v592 = vld [vmem:[%s178 + $0x408] sm:$0xff]
        %v593 = vld [vmem:[%s178 + $0x410] sm:$0xff]
        %v594 = vld [vmem:[%s178 + $0x418] sm:$0xff]
        %v595 = vld [vmem:[%s178 + $0x420] sm:$0xff]
        %v596 = vld [vmem:[%s178 + $0x428] sm:$0xff]
        %v597 = vld [vmem:[%s178 + $0x430] sm:$0xff]
        %v598 = vld [vmem:[%s178 + $0x438] sm:$0xff]
        %v599 = vld [vmem:[%s178 + $0x440] sm:$0xff]
        %v600 = vld [vmem:[%s178 + $0x448] sm:$0xff]
        %v601 = vld [vmem:[%s178 + $0x450] sm:$0xff]
        %v602 = vld [vmem:[%s178 + $0x458] sm:$0xff]
        %v603 = vld [vmem:[%s178 + $0x460] sm:$0xff]
        %v604 = vld [vmem:[%s178 + $0x468] sm:$0xff]
        %v605 = vld [vmem:[%s178 + $0x470] sm:$0xff]
        %v606 = vld [vmem:[%s178 + $0x478] sm:$0xff]
        %v607 = vld [vmem:[%s178 + $0x480] sm:$0xff]
        %v608 = vld [vmem:[%s178 + $0x488] sm:$0xff]
        %v609 = vld [vmem:[%s178 + $0x490] sm:$0xff]
        %v610 = vld [vmem:[%s178 + $0x498] sm:$0xff]
        %v611 = vld [vmem:[%s178 + $0x4a0] sm:$0xff]
        %v612 = vld [vmem:[%s178 + $0x4a8] sm:$0xff]
        %v613 = vld [vmem:[%s178 + $0x4b0] sm:$0xff]
        %v614 = vld [vmem:[%s178 + $0x4b8] sm:$0xff]
        %v615 = vld [vmem:[%s178 + $0x4c0] sm:$0xff]
        %v616 = vld [vmem:[%s178 + $0x4c8] sm:$0xff]
        %v617 = vld [vmem:[%s178 + $0x4d0] sm:$0xff]
        %v618 = vld [vmem:[%s178 + $0x4d8] sm:$0xff]
        %v619 = vld [vmem:[%s178 + $0x4e0] sm:$0xff]
        %v620 = vld [vmem:[%s178 + $0x4e8] sm:$0xff]
        %v621 = vld [vmem:[%s178 + $0x4f0] sm:$0xff]
        %v622 = vld [vmem:[%s178 + $0x4f8] sm:$0xff]
        %v623 = vld [vmem:[%s178 + $0x500] sm:$0xff]
        %v624 = vld [vmem:[%s178 + $0x508] sm:$0xff]
        %v625 = vld [vmem:[%s178 + $0x510] sm:$0xff]
        %v626 = vld [vmem:[%s178 + $0x518] sm:$0xff]
        %v627 = vld [vmem:[%s178 + $0x520] sm:$0xff]
        %v628 = vld [vmem:[%s178 + $0x528] sm:$0xff]
        %v629 = vld [vmem:[%s178 + $0x530] sm:$0xff]
        %v630 = vld [vmem:[%s178 + $0x538] sm:$0xff]
        %v631 = vld [vmem:[%s178 + $0x540] sm:$0xff]
        %v632 = vld [vmem:[%s178 + $0x548] sm:$0xff]
        %v633 = vld [vmem:[%s178 + $0x550] sm:$0xff]
        %v634 = vld [vmem:[%s178 + $0x558] sm:$0xff]
        %v635 = vld [vmem:[%s178 + $0x560] sm:$0xff]
        %v636 = vld [vmem:[%s178 + $0x568] sm:$0xff]
        %v637 = vld [vmem:[%s178 + $0x570] sm:$0xff]
        %v638 = vld [vmem:[%s178 + $0x578] sm:$0xff]
        %v639 = vld [vmem:[%s178 + $0x580] sm:$0xff]
        %v640 = vld [vmem:[%s178 + $0x588] sm:$0xff]
        %v641 = vld [vmem:[%s178 + $0x590] sm:$0xff]
        %v642 = vld [vmem:[%s178 + $0x598] sm:$0xff]
        %v643 = vld [vmem:[%s178 + $0x5a0] sm:$0xff]
        %v644 = vld [vmem:[%s178 + $0x5a8] sm:$0xff]
        %v645 = vld [vmem:[%s178 + $0x5b0] sm:$0xff]
        %v646 = vld [vmem:[%s178 + $0x5b8] sm:$0xff]
        %v647 = vld [vmem:[%s178 + $0x5c0] sm:$0xff]
        %v648 = vld [vmem:[%s178 + $0x5c8] sm:$0xff]
        %v649 = vld [vmem:[%s178 + $0x5d0] sm:$0xff]
        %v650 = vld [vmem:[%s178 + $0x5d8] sm:$0xff]
        %v651 = vld [vmem:[%s178 + $0x5e0] sm:$0xff]
        %v652 = vld [vmem:[%s178 + $0x5e8] sm:$0xff]
        %v653 = vld [vmem:[%s178 + $0x5f0] sm:$0xff]
        %v654 = vld [vmem:[%s178 + $0x5f8] sm:$0xff]
        %v655 = vld [vmem:[%s178 + $0x600] sm:$0xff]
        %v656 = vld [vmem:[%s178 + $0x608] sm:$0xff]
        %v657 = vld [vmem:[%s178 + $0x610] sm:$0xff]
        %v658 = vld [vmem:[%s178 + $0x618] sm:$0xff]
        %v659 = vld [vmem:[%s178 + $0x620] sm:$0xff]
        %v660 = vld [vmem:[%s178 + $0x628] sm:$0xff]
        %v661 = vld [vmem:[%s178 + $0x630] sm:$0xff]
        %v662 = vld [vmem:[%s178 + $0x638] sm:$0xff]
        %v663 = vld [vmem:[%s178 + $0x640] sm:$0xff]
        %v664 = vld [vmem:[%s178 + $0x648] sm:$0xff]
        %v665 = vld [vmem:[%s178 + $0x650] sm:$0xff]
        %v666 = vld [vmem:[%s178 + $0x658] sm:$0xff]
        %v667 = vld [vmem:[%s178 + $0x660] sm:$0xff]
        %v668 = vld [vmem:[%s178 + $0x668] sm:$0xff]
        %v669 = vld [vmem:[%s178 + $0x670] sm:$0xff]
        %v670 = vld [vmem:[%s178 + $0x678] sm:$0xff]
        %v671 = vld [vmem:[%s178 + $0x680] sm:$0xff]
        %v672 = vld [vmem:[%s178 + $0x688] sm:$0xff]
        %v673 = vld [vmem:[%s178 + $0x690] sm:$0xff]
        %v674 = vld [vmem:[%s178 + $0x698] sm:$0xff]
        %v675 = vld [vmem:[%s178 + $0x6a0] sm:$0xff]
        %v676 = vld [vmem:[%s178 + $0x6a8] sm:$0xff]
        %v677 = vld [vmem:[%s178 + $0x6b0] sm:$0xff]
        %v678 = vld [vmem:[%s178 + $0x6b8] sm:$0xff]
        %v679 = vld [vmem:[%s178 + $0x6c0] sm:$0xff]
        %v680 = vld [vmem:[%s178 + $0x6c8] sm:$0xff]
        %v681 = vld [vmem:[%s178 + $0x6d0] sm:$0xff]
        %v682 = vld [vmem:[%s178 + $0x6d8] sm:$0xff]
        %v683 = vld [vmem:[%s178 + $0x6e0] sm:$0xff]
        %v684 = vld [vmem:[%s178 + $0x6e8] sm:$0xff]
        %v685 = vld [vmem:[%s178 + $0x6f0] sm:$0xff]
        %v686 = vld [vmem:[%s178 + $0x6f8] sm:$0xff]
        %v687 = vld [vmem:[%s178 + $0x700] sm:$0xff]
        %v688 = vld [vmem:[%s178 + $0x708] sm:$0xff]
        %v689 = vld [vmem:[%s178 + $0x710] sm:$0xff]
        %v690 = vld [vmem:[%s178 + $0x718] sm:$0xff]
        %v691 = vld [vmem:[%s178 + $0x720] sm:$0xff]
        %v692 = vld [vmem:[%s178 + $0x728] sm:$0xff]
        %v693 = vld [vmem:[%s178 + $0x730] sm:$0xff]
        %v694 = vld [vmem:[%s178 + $0x738] sm:$0xff]
        %v695 = vld [vmem:[%s178 + $0x740] sm:$0xff]
        %v696 = vld [vmem:[%s178 + $0x748] sm:$0xff]
        %v697 = vld [vmem:[%s178 + $0x750] sm:$0xff]
        %v698 = vld [vmem:[%s178 + $0x758] sm:$0xff]
        %v699 = vld [vmem:[%s178 + $0x760] sm:$0xff]
        %v700 = vld [vmem:[%s178 + $0x768] sm:$0xff]
        %v701 = vld [vmem:[%s178 + $0x770] sm:$0xff]
        %v702 = vld [vmem:[%s178 + $0x778] sm:$0xff]
        %v703 = vld [vmem:[%s178 + $0x780] sm:$0xff]
        %v704 = vld [vmem:[%s178 + $0x788] sm:$0xff]
        %v705 = vld [vmem:[%s178 + $0x790] sm:$0xff]
        %v706 = vld [vmem:[%s178 + $0x798] sm:$0xff]
        %v707 = vld [vmem:[%s178 + $0x7a0] sm:$0xff]
        %v708 = vld [vmem:[%s178 + $0x7a8] sm:$0xff]
        %v709 = vld [vmem:[%s178 + $0x7b0] sm:$0xff]
        %v710 = vld [vmem:[%s178 + $0x7b8] sm:$0xff]
        %v711 = vld [vmem:[%s178 + $0x7c0] sm:$0xff]
        %v712 = vld [vmem:[%s178 + $0x7c8] sm:$0xff]
        %v713 = vld [vmem:[%s178 + $0x7d0] sm:$0xff]
        %v714 = vld [vmem:[%s178 + $0x7d8] sm:$0xff]
        %v715 = vld [vmem:[%s178 + $0x7e0] sm:$0xff]
        %v716 = vld [vmem:[%s178 + $0x7e8] sm:$0xff]
        %v717 = vld [vmem:[%s178 + $0x7f0] sm:$0xff]
        %v718 = vld [vmem:[%s178 + $0x7f8] sm:$0xff]
        %v719 = vsub.f32 %v207, %v463
        %v720 = vsub.f32 %v208, %v464
        %v721 = vsub.f32 %v209, %v465
        %v722 = vsub.f32 %v210, %v466
        %v723 = vsub.f32 %v211, %v467
        %v724 = vsub.f32 %v212, %v468
        %v725 = vsub.f32 %v213, %v469
        %v726 = vsub.f32 %v214, %v470
        %v727 = vsub.f32 %v215, %v471
        %v728 = vsub.f32 %v216, %v472
        %v729 = vsub.f32 %v217, %v473
        %v730 = vsub.f32 %v218, %v474
        %v731 = vsub.f32 %v219, %v475
        %v732 = vsub.f32 %v220, %v476
        %v733 = vsub.f32 %v221, %v477
        %v734 = vsub.f32 %v222, %v478
        %v735 = vsub.f32 %v223, %v479
        %v736 = vsub.f32 %v224, %v480
        %v737 = vsub.f32 %v225, %v481
        %v738 = vsub.f32 %v226, %v482
        %v739 = vsub.f32 %v227, %v483
        %v740 = vsub.f32 %v228, %v484
        %v741 = vsub.f32 %v229, %v485
        %v742 = vsub.f32 %v230, %v486
        %v743 = vsub.f32 %v231, %v487
        %v744 = vsub.f32 %v232, %v488
        %v745 = vsub.f32 %v233, %v489
        %v746 = vsub.f32 %v234, %v490
        %v747 = vsub.f32 %v235, %v491
        %v748 = vsub.f32 %v236, %v492
        %v749 = vsub.f32 %v237, %v493
        %v750 = vsub.f32 %v238, %v494
        %v751 = vsub.f32 %v239, %v495
        %v752 = vsub.f32 %v240, %v496
        %v753 = vsub.f32 %v241, %v497
        %v754 = vsub.f32 %v242, %v498
        %v755 = vsub.f32 %v243, %v499
        %v756 = vsub.f32 %v244, %v500
        %v757 = vsub.f32 %v245, %v501
        %v758 = vsub.f32 %v246, %v502
        %v759 = vsub.f32 %v247, %v503
        %v760 = vsub.f32 %v248, %v504
        %v761 = vsub.f32 %v249, %v505
        %v762 = vsub.f32 %v250, %v506
        %v763 = vsub.f32 %v251, %v507
        %v764 = vsub.f32 %v252, %v508
        %v765 = vsub.f32 %v253, %v509
        %v766 = vsub.f32 %v254, %v510
        %v767 = vsub.f32 %v255, %v511
        %v768 = vsub.f32 %v256, %v512
        %v769 = vsub.f32 %v257, %v513
        %v770 = vsub.f32 %v258, %v514
        %v771 = vsub.f32 %v259, %v515
        %v772 = vsub.f32 %v260, %v516
        %v773 = vsub.f32 %v261, %v517
        %v774 = vsub.f32 %v262, %v518
        %v775 = vsub.f32 %v263, %v519
        %v776 = vsub.f32 %v264, %v520
        %v777 = vsub.f32 %v265, %v521
        %v778 = vsub.f32 %v266, %v522
        %v779 = vsub.f32 %v267, %v523
        %v780 = vsub.f32 %v268, %v524
        %v781 = vsub.f32 %v269, %v525
        %v782 = vsub.f32 %v270, %v526
        %v783 = vsub.f32 %v271, %v527
        %v784 = vsub.f32 %v272, %v528
        %v785 = vsub.f32 %v273, %v529
        %v786 = vsub.f32 %v274, %v530
        %v787 = vsub.f32 %v275, %v531
        %v788 = vsub.f32 %v276, %v532
        %v789 = vsub.f32 %v277, %v533
        %v790 = vsub.f32 %v278, %v534
        %v791 = vsub.f32 %v279, %v535
        %v792 = vsub.f32 %v280, %v536
        %v793 = vsub.f32 %v281, %v537
        %v794 = vsub.f32 %v282, %v538
        %v795 = vsub.f32 %v283, %v539
        %v796 = vsub.f32 %v284, %v540
        %v797 = vsub.f32 %v285, %v541
        %v798 = vsub.f32 %v286, %v542
        %v799 = vsub.f32 %v287, %v543
        %v800 = vsub.f32 %v288, %v544
        %v801 = vsub.f32 %v289, %v545
        %v802 = vsub.f32 %v290, %v546
        %v803 = vsub.f32 %v291, %v547
        %v804 = vsub.f32 %v292, %v548
        %v805 = vsub.f32 %v293, %v549
        %v806 = vsub.f32 %v294, %v550
        %v807 = vsub.f32 %v295, %v551
        %v808 = vsub.f32 %v296, %v552
        %v809 = vsub.f32 %v297, %v553
        %v810 = vsub.f32 %v298, %v554
        %v811 = vsub.f32 %v299, %v555
        %v812 = vsub.f32 %v300, %v556
        %v813 = vsub.f32 %v301, %v557
        %v814 = vsub.f32 %v302, %v558
        %v815 = vsub.f32 %v303, %v559
        %v816 = vsub.f32 %v304, %v560
        %v817 = vsub.f32 %v305, %v561
        %v818 = vsub.f32 %v306, %v562
        %v819 = vsub.f32 %v307, %v563
        %v820 = vsub.f32 %v308, %v564
        %v821 = vsub.f32 %v309, %v565
        %v822 = vsub.f32 %v310, %v566
        %v823 = vsub.f32 %v311, %v567
        %v824 = vsub.f32 %v312, %v568
        %v825 = vsub.f32 %v313, %v569
        %v826 = vsub.f32 %v314, %v570
        %v827 = vsub.f32 %v315, %v571
        %v828 = vsub.f32 %v316, %v572
        %v829 = vsub.f32 %v317, %v573
        %v830 = vsub.f32 %v318, %v574
        %v831 = vsub.f32 %v319, %v575
        %v832 = vsub.f32 %v320, %v576
        %v833 = vsub.f32 %v321, %v577
        %v834 = vsub.f32 %v322, %v578
        %v835 = vsub.f32 %v323, %v579
        %v836 = vsub.f32 %v324, %v580
        %v837 = vsub.f32 %v325, %v581
        %v838 = vsub.f32 %v326, %v582
        %v839 = vsub.f32 %v327, %v583
        %v840 = vsub.f32 %v328, %v584
        %v841 = vsub.f32 %v329, %v585
        %v842 = vsub.f32 %v330, %v586
        %v843 = vsub.f32 %v331, %v587
        %v844 = vsub.f32 %v332, %v588
        %v845 = vsub.f32 %v333, %v589
        %v846 = vsub.f32 %v334, %v590
        %v847 = vsub.f32 %v335, %v591
        %v848 = vsub.f32 %v336, %v592
        %v849 = vsub.f32 %v337, %v593
        %v850 = vsub.f32 %v338, %v594
        %v851 = vsub.f32 %v339, %v595
        %v852 = vsub.f32 %v340, %v596
        %v853 = vsub.f32 %v341, %v597
        %v854 = vsub.f32 %v342, %v598
        %v855 = vsub.f32 %v343, %v599
        %v856 = vsub.f32 %v344, %v600
        %v857 = vsub.f32 %v345, %v601
        %v858 = vsub.f32 %v346, %v602
        %v859 = vsub.f32 %v347, %v603
        %v860 = vsub.f32 %v348, %v604
        %v861 = vsub.f32 %v349, %v605
        %v862 = vsub.f32 %v350, %v606
        %v863 = vsub.f32 %v351, %v607
        %v864 = vsub.f32 %v352, %v608
        %v865 = vsub.f32 %v353, %v609
        %v866 = vsub.f32 %v354, %v610
        %v867 = vsub.f32 %v355, %v611
        %v868 = vsub.f32 %v356, %v612
        %v869 = vsub.f32 %v357, %v613
        %v870 = vsub.f32 %v358, %v614
        %v871 = vsub.f32 %v359, %v615
        %v872 = vsub.f32 %v360, %v616
        %v873 = vsub.f32 %v361, %v617
        %v874 = vsub.f32 %v362, %v618
        %v875 = vsub.f32 %v363, %v619
        %v876 = vsub.f32 %v364, %v620
        %v877 = vsub.f32 %v365, %v621
        %v878 = vsub.f32 %v366, %v622
        %v879 = vsub.f32 %v367, %v623
        %v880 = vsub.f32 %v368, %v624
        %v881 = vsub.f32 %v369, %v625
        %v882 = vsub.f32 %v370, %v626
        %v883 = vsub.f32 %v371, %v627
        %v884 = vsub.f32 %v372, %v628
        %v885 = vsub.f32 %v373, %v629
        %v886 = vsub.f32 %v374, %v630
        %v887 = vsub.f32 %v375, %v631
        %v888 = vsub.f32 %v376, %v632
        %v889 = vsub.f32 %v377, %v633
        %v890 = vsub.f32 %v378, %v634
        %v891 = vsub.f32 %v379, %v635
        %v892 = vsub.f32 %v380, %v636
        %v893 = vsub.f32 %v381, %v637
        %v894 = vsub.f32 %v382, %v638
        %v895 = vsub.f32 %v383, %v639
        %v896 = vsub.f32 %v384, %v640
        %v897 = vsub.f32 %v385, %v641
        %v898 = vsub.f32 %v386, %v642
        %v899 = vsub.f32 %v387, %v643
        %v900 = vsub.f32 %v388, %v644
        %v901 = vsub.f32 %v389, %v645
        %v902 = vsub.f32 %v390, %v646
        %v903 = vsub.f32 %v391, %v647
        %v904 = vsub.f32 %v392, %v648
        %v905 = vsub.f32 %v393, %v649
        %v906 = vsub.f32 %v394, %v650
        %v907 = vsub.f32 %v395, %v651
        %v908 = vsub.f32 %v396, %v652
        %v909 = vsub.f32 %v397, %v653
        %v910 = vsub.f32 %v398, %v654
        %v911 = vsub.f32 %v399, %v655
        %v912 = vsub.f32 %v400, %v656
        %v913 = vsub.f32 %v401, %v657
        %v914 = vsub.f32 %v402, %v658
        %v915 = vsub.f32 %v403, %v659
        %v916 = vsub.f32 %v404, %v660
        %v917 = vsub.f32 %v405, %v661
        %v918 = vsub.f32 %v406, %v662
        %v919 = vsub.f32 %v407, %v663
        %v920 = vsub.f32 %v408, %v664
        %v921 = vsub.f32 %v409, %v665
        %v922 = vsub.f32 %v410, %v666
        %v923 = vsub.f32 %v411, %v667
        %v924 = vsub.f32 %v412, %v668
        %v925 = vsub.f32 %v413, %v669
        %v926 = vsub.f32 %v414, %v670
        %v927 = vsub.f32 %v415, %v671
        %v928 = vsub.f32 %v416, %v672
        %v929 = vsub.f32 %v417, %v673
        %v930 = vsub.f32 %v418, %v674
        %v931 = vsub.f32 %v419, %v675
        %v932 = vsub.f32 %v420, %v676
        %v933 = vsub.f32 %v421, %v677
        %v934 = vsub.f32 %v422, %v678
        %v935 = vsub.f32 %v423, %v679
        %v936 = vsub.f32 %v424, %v680
        %v937 = vsub.f32 %v425, %v681
        %v938 = vsub.f32 %v426, %v682
        %v939 = vsub.f32 %v427, %v683
        %v940 = vsub.f32 %v428, %v684
        %v941 = vsub.f32 %v429, %v685
        %v942 = vsub.f32 %v430, %v686
        %v943 = vsub.f32 %v431, %v687
        %v944 = vsub.f32 %v432, %v688
        %v945 = vsub.f32 %v433, %v689
        %v946 = vsub.f32 %v434, %v690
        %v947 = vsub.f32 %v435, %v691
        %v948 = vsub.f32 %v436, %v692
        %v949 = vsub.f32 %v437, %v693
        %v950 = vsub.f32 %v438, %v694
        %v951 = vsub.f32 %v439, %v695
        %v952 = vsub.f32 %v440, %v696
        %v953 = vsub.f32 %v441, %v697
        %v954 = vsub.f32 %v442, %v698
        %v955 = vsub.f32 %v443, %v699
        %v956 = vsub.f32 %v444, %v700
        %v957 = vsub.f32 %v445, %v701
        %v958 = vsub.f32 %v446, %v702
        %v959 = vsub.f32 %v447, %v703
        %v960 = vsub.f32 %v448, %v704
        %v961 = vsub.f32 %v449, %v705
        %v962 = vsub.f32 %v450, %v706
        %v963 = vsub.f32 %v451, %v707
        %v964 = vsub.f32 %v452, %v708
        %v965 = vsub.f32 %v453, %v709
        %v966 = vsub.f32 %v454, %v710
        %v967 = vsub.f32 %v455, %v711
        %v968 = vsub.f32 %v456, %v712
        %v969 = vsub.f32 %v457, %v713
        %v970 = vsub.f32 %v458, %v714
        %v971 = vsub.f32 %v459, %v715
        %v972 = vsub.f32 %v460, %v716
        %v973 = vsub.f32 %v461, %v717
        %v974 = vsub.f32 %v462, %v718
        %v975 = vmax.f32 %v719, 0.0
        %v976 = vmax.f32 %v720, 0.0
        %v977 = vmax.f32 %v721, 0.0
        %v978 = vmax.f32 %v722, 0.0
        %v979 = vmax.f32 %v723, 0.0
        %v980 = vmax.f32 %v724, 0.0
        %v981 = vmax.f32 %v725, 0.0
        %v982 = vmax.f32 %v726, 0.0
        %v983 = vmax.f32 %v727, 0.0
        %v984 = vmax.f32 %v728, 0.0
        %v985 = vmax.f32 %v729, 0.0
        %v986 = vmax.f32 %v730, 0.0
        %v987 = vmax.f32 %v731, 0.0
        %v988 = vmax.f32 %v732, 0.0
        %v989 = vmax.f32 %v733, 0.0
        %v990 = vmax.f32 %v734, 0.0
        %v991 = vmax.f32 %v735, 0.0
        %v992 = vmax.f32 %v736, 0.0
        %v993 = vmax.f32 %v737, 0.0
        %v994 = vmax.f32 %v738, 0.0
        %v995 = vmax.f32 %v739, 0.0
        %v996 = vmax.f32 %v740, 0.0
        %v997 = vmax.f32 %v741, 0.0
        %v998 = vmax.f32 %v742, 0.0
        %v999 = vmax.f32 %v743, 0.0
        %v1000 = vmax.f32 %v744, 0.0
        %v1001 = vmax.f32 %v745, 0.0
        %v1002 = vmax.f32 %v746, 0.0
        %v1003 = vmax.f32 %v747, 0.0
        %v1004 = vmax.f32 %v748, 0.0
        %v1005 = vmax.f32 %v749, 0.0
        %v1006 = vmax.f32 %v750, 0.0
        %v1007 = vmax.f32 %v751, 0.0
        %v1008 = vmax.f32 %v752, 0.0
        %v1009 = vmax.f32 %v753, 0.0
        %v1010 = vmax.f32 %v754, 0.0
        %v1011 = vmax.f32 %v755, 0.0
        %v1012 = vmax.f32 %v756, 0.0
        %v1013 = vmax.f32 %v757, 0.0
        %v1014 = vmax.f32 %v758, 0.0
        %v1015 = vmax.f32 %v759, 0.0
        %v1016 = vmax.f32 %v760, 0.0
        %v1017 = vmax.f32 %v761, 0.0
        %v1018 = vmax.f32 %v762, 0.0
        %v1019 = vmax.f32 %v763, 0.0
        %v1020 = vmax.f32 %v764, 0.0
        %v1021 = vmax.f32 %v765, 0.0
        %v1022 = vmax.f32 %v766, 0.0
        %v1023 = vmax.f32 %v767, 0.0
        %v1024 = vmax.f32 %v768, 0.0
        %v1025 = vmax.f32 %v769, 0.0
        %v1026 = vmax.f32 %v770, 0.0
        %v1027 = vmax.f32 %v771, 0.0
        %v1028 = vmax.f32 %v772, 0.0
        %v1029 = vmax.f32 %v773, 0.0
        %v1030 = vmax.f32 %v774, 0.0
        %v1031 = vmax.f32 %v775, 0.0
        %v1032 = vmax.f32 %v776, 0.0
        %v1033 = vmax.f32 %v777, 0.0
        %v1034 = vmax.f32 %v778, 0.0
        %v1035 = vmax.f32 %v779, 0.0
        %v1036 = vmax.f32 %v780, 0.0
        %v1037 = vmax.f32 %v781, 0.0
        %v1038 = vmax.f32 %v782, 0.0
        %v1039 = vmax.f32 %v783, 0.0
        %v1040 = vmax.f32 %v784, 0.0
        %v1041 = vmax.f32 %v785, 0.0
        %v1042 = vmax.f32 %v786, 0.0
        %v1043 = vmax.f32 %v787, 0.0
        %v1044 = vmax.f32 %v788, 0.0
        %v1045 = vmax.f32 %v789, 0.0
        %v1046 = vmax.f32 %v790, 0.0
        %v1047 = vmax.f32 %v791, 0.0
        %v1048 = vmax.f32 %v792, 0.0
        %v1049 = vmax.f32 %v793, 0.0
        %v1050 = vmax.f32 %v794, 0.0
        %v1051 = vmax.f32 %v795, 0.0
        %v1052 = vmax.f32 %v796, 0.0
        %v1053 = vmax.f32 %v797, 0.0
        %v1054 = vmax.f32 %v798, 0.0
        %v1055 = vmax.f32 %v799, 0.0
        %v1056 = vmax.f32 %v800, 0.0
        %v1057 = vmax.f32 %v801, 0.0
        %v1058 = vmax.f32 %v802, 0.0
        %v1059 = vmax.f32 %v803, 0.0
        %v1060 = vmax.f32 %v804, 0.0
        %v1061 = vmax.f32 %v805, 0.0
        %v1062 = vmax.f32 %v806, 0.0
        %v1063 = vmax.f32 %v807, 0.0
        %v1064 = vmax.f32 %v808, 0.0
        %v1065 = vmax.f32 %v809, 0.0
        %v1066 = vmax.f32 %v810, 0.0
        %v1067 = vmax.f32 %v811, 0.0
        %v1068 = vmax.f32 %v812, 0.0
        %v1069 = vmax.f32 %v813, 0.0
        %v1070 = vmax.f32 %v814, 0.0
        %v1071 = vmax.f32 %v815, 0.0
        %v1072 = vmax.f32 %v816, 0.0
        %v1073 = vmax.f32 %v817, 0.0
        %v1074 = vmax.f32 %v818, 0.0
        %v1075 = vmax.f32 %v819, 0.0
        %v1076 = vmax.f32 %v820, 0.0
        %v1077 = vmax.f32 %v821, 0.0
        %v1078 = vmax.f32 %v822, 0.0
        %v1079 = vmax.f32 %v823, 0.0
        %v1080 = vmax.f32 %v824, 0.0
        %v1081 = vmax.f32 %v825, 0.0
        %v1082 = vmax.f32 %v826, 0.0
        %v1083 = vmax.f32 %v827, 0.0
        %v1084 = vmax.f32 %v828, 0.0
        %v1085 = vmax.f32 %v829, 0.0
        %v1086 = vmax.f32 %v830, 0.0
        %v1087 = vmax.f32 %v831, 0.0
        %v1088 = vmax.f32 %v832, 0.0
        %v1089 = vmax.f32 %v833, 0.0
        %v1090 = vmax.f32 %v834, 0.0
        %v1091 = vmax.f32 %v835, 0.0
        %v1092 = vmax.f32 %v836, 0.0
        %v1093 = vmax.f32 %v837, 0.0
        %v1094 = vmax.f32 %v838, 0.0
        %v1095 = vmax.f32 %v839, 0.0
        %v1096 = vmax.f32 %v840, 0.0
        %v1097 = vmax.f32 %v841, 0.0
        %v1098 = vmax.f32 %v842, 0.0
        %v1099 = vmax.f32 %v843, 0.0
        %v1100 = vmax.f32 %v844, 0.0
        %v1101 = vmax.f32 %v845, 0.0
        %v1102 = vmax.f32 %v846, 0.0
        %v1103 = vmax.f32 %v847, 0.0
        %v1104 = vmax.f32 %v848, 0.0
        %v1105 = vmax.f32 %v849, 0.0
        %v1106 = vmax.f32 %v850, 0.0
        %v1107 = vmax.f32 %v851, 0.0
        %v1108 = vmax.f32 %v852, 0.0
        %v1109 = vmax.f32 %v853, 0.0
        %v1110 = vmax.f32 %v854, 0.0
        %v1111 = vmax.f32 %v855, 0.0
        %v1112 = vmax.f32 %v856, 0.0
        %v1113 = vmax.f32 %v857, 0.0
        %v1114 = vmax.f32 %v858, 0.0
        %v1115 = vmax.f32 %v859, 0.0
        %v1116 = vmax.f32 %v860, 0.0
        %v1117 = vmax.f32 %v861, 0.0
        %v1118 = vmax.f32 %v862, 0.0
        %v1119 = vmax.f32 %v863, 0.0
        %v1120 = vmax.f32 %v864, 0.0
        %v1121 = vmax.f32 %v865, 0.0
        %v1122 = vmax.f32 %v866, 0.0
        %v1123 = vmax.f32 %v867, 0.0
        %v1124 = vmax.f32 %v868, 0.0
        %v1125 = vmax.f32 %v869, 0.0
        %v1126 = vmax.f32 %v870, 0.0
        %v1127 = vmax.f32 %v871, 0.0
        %v1128 = vmax.f32 %v872, 0.0
        %v1129 = vmax.f32 %v873, 0.0
        %v1130 = vmax.f32 %v874, 0.0
        %v1131 = vmax.f32 %v875, 0.0
        %v1132 = vmax.f32 %v876, 0.0
        %v1133 = vmax.f32 %v877, 0.0
        %v1134 = vmax.f32 %v878, 0.0
        %v1135 = vmax.f32 %v879, 0.0
        %v1136 = vmax.f32 %v880, 0.0
        %v1137 = vmax.f32 %v881, 0.0
        %v1138 = vmax.f32 %v882, 0.0
        %v1139 = vmax.f32 %v883, 0.0
        %v1140 = vmax.f32 %v884, 0.0
        %v1141 = vmax.f32 %v885, 0.0
        %v1142 = vmax.f32 %v886, 0.0
        %v1143 = vmax.f32 %v887, 0.0
        %v1144 = vmax.f32 %v888, 0.0
        %v1145 = vmax.f32 %v889, 0.0
        %v1146 = vmax.f32 %v890, 0.0
        %v1147 = vmax.f32 %v891, 0.0
        %v1148 = vmax.f32 %v892, 0.0
        %v1149 = vmax.f32 %v893, 0.0
        %v1150 = vmax.f32 %v894, 0.0
        %v1151 = vmax.f32 %v895, 0.0
        %v1152 = vmax.f32 %v896, 0.0
        %v1153 = vmax.f32 %v897, 0.0
        %v1154 = vmax.f32 %v898, 0.0
        %v1155 = vmax.f32 %v899, 0.0
        %v1156 = vmax.f32 %v900, 0.0
        %v1157 = vmax.f32 %v901, 0.0
        %v1158 = vmax.f32 %v902, 0.0
        %v1159 = vmax.f32 %v903, 0.0
        %v1160 = vmax.f32 %v904, 0.0
        %v1161 = vmax.f32 %v905, 0.0
        %v1162 = vmax.f32 %v906, 0.0
        %v1163 = vmax.f32 %v907, 0.0
        %v1164 = vmax.f32 %v908, 0.0
        %v1165 = vmax.f32 %v909, 0.0
        %v1166 = vmax.f32 %v910, 0.0
        %v1167 = vmax.f32 %v911, 0.0
        %v1168 = vmax.f32 %v912, 0.0
        %v1169 = vmax.f32 %v913, 0.0
        %v1170 = vmax.f32 %v914, 0.0
        %v1171 = vmax.f32 %v915, 0.0
        %v1172 = vmax.f32 %v916, 0.0
        %v1173 = vmax.f32 %v917, 0.0
        %v1174 = vmax.f32 %v918, 0.0
        %v1175 = vmax.f32 %v919, 0.0
        %v1176 = vmax.f32 %v920, 0.0
        %v1177 = vmax.f32 %v921, 0.0
        %v1178 = vmax.f32 %v922, 0.0
        %v1179 = vmax.f32 %v923, 0.0
        %v1180 = vmax.f32 %v924, 0.0
        %v1181 = vmax.f32 %v925, 0.0
        %v1182 = vmax.f32 %v926, 0.0
        %v1183 = vmax.f32 %v927, 0.0
        %v1184 = vmax.f32 %v928, 0.0
        %v1185 = vmax.f32 %v929, 0.0
        %v1186 = vmax.f32 %v930, 0.0
        %v1187 = vmax.f32 %v931, 0.0
        %v1188 = vmax.f32 %v932, 0.0
        %v1189 = vmax.f32 %v933, 0.0
        %v1190 = vmax.f32 %v934, 0.0
        %v1191 = vmax.f32 %v935, 0.0
        %v1192 = vmax.f32 %v936, 0.0
        %v1193 = vmax.f32 %v937, 0.0
        %v1194 = vmax.f32 %v938, 0.0
        %v1195 = vmax.f32 %v939, 0.0
        %v1196 = vmax.f32 %v940, 0.0
        %v1197 = vmax.f32 %v941, 0.0
        %v1198 = vmax.f32 %v942, 0.0
        %v1199 = vmax.f32 %v943, 0.0
        %v1200 = vmax.f32 %v944, 0.0
        %v1201 = vmax.f32 %v945, 0.0
        %v1202 = vmax.f32 %v946, 0.0
        %v1203 = vmax.f32 %v947, 0.0
        %v1204 = vmax.f32 %v948, 0.0
        %v1205 = vmax.f32 %v949, 0.0
        %v1206 = vmax.f32 %v950, 0.0
        %v1207 = vmax.f32 %v951, 0.0
        %v1208 = vmax.f32 %v952, 0.0
        %v1209 = vmax.f32 %v953, 0.0
        %v1210 = vmax.f32 %v954, 0.0
        %v1211 = vmax.f32 %v955, 0.0
        %v1212 = vmax.f32 %v956, 0.0
        %v1213 = vmax.f32 %v957, 0.0
        %v1214 = vmax.f32 %v958, 0.0
        %v1215 = vmax.f32 %v959, 0.0
        %v1216 = vmax.f32 %v960, 0.0
        %v1217 = vmax.f32 %v961, 0.0
        %v1218 = vmax.f32 %v962, 0.0
        %v1219 = vmax.f32 %v963, 0.0
        %v1220 = vmax.f32 %v964, 0.0
        %v1221 = vmax.f32 %v965, 0.0
        %v1222 = vmax.f32 %v966, 0.0
        %v1223 = vmax.f32 %v967, 0.0
        %v1224 = vmax.f32 %v968, 0.0
        %v1225 = vmax.f32 %v969, 0.0
        %v1226 = vmax.f32 %v970, 0.0
        %v1227 = vmax.f32 %v971, 0.0
        %v1228 = vmax.f32 %v972, 0.0
        %v1229 = vmax.f32 %v973, 0.0
        %v1230 = vmax.f32 %v974, 0.0
        %1231 = vst [vmem:[%s203] sm:$0xff] %v975
        %1232 = vst [vmem:[%s203 + $0x8] sm:$0xff] %v976
        %1233 = vst [vmem:[%s203 + $0x10] sm:$0xff] %v977
        %1234 = vst [vmem:[%s203 + $0x18] sm:$0xff] %v978
        %1235 = vst [vmem:[%s203 + $0x20] sm:$0xff] %v979
        %1236 = vst [vmem:[%s203 + $0x28] sm:$0xff] %v980
        %1237 = vst [vmem:[%s203 + $0x30] sm:$0xff] %v981
        %1238 = vst [vmem:[%s203 + $0x38] sm:$0xff] %v982
        %1239 = vst [vmem:[%s203 + $0x40] sm:$0xff] %v983
        %1240 = vst [vmem:[%s203 + $0x48] sm:$0xff] %v984
        %1241 = vst [vmem:[%s203 + $0x50] sm:$0xff] %v985
        %1242 = vst [vmem:[%s203 + $0x58] sm:$0xff] %v986
        %1243 = vst [vmem:[%s203 + $0x60] sm:$0xff] %v987
        %1244 = vst [vmem:[%s203 + $0x68] sm:$0xff] %v988
        %1245 = vst [vmem:[%s203 + $0x70] sm:$0xff] %v989
        %1246 = vst [vmem:[%s203 + $0x78] sm:$0xff] %v990
        %1247 = vst [vmem:[%s203 + $0x80] sm:$0xff] %v991
        %1248 = vst [vmem:[%s203 + $0x88] sm:$0xff] %v992
        %1249 = vst [vmem:[%s203 + $0x90] sm:$0xff] %v993
        %1250 = vst [vmem:[%s203 + $0x98] sm:$0xff] %v994
        %1251 = vst [vmem:[%s203 + $0xa0] sm:$0xff] %v995
        %1252 = vst [vmem:[%s203 + $0xa8] sm:$0xff] %v996
        %1253 = vst [vmem:[%s203 + $0xb0] sm:$0xff] %v997
        %1254 = vst [vmem:[%s203 + $0xb8] sm:$0xff] %v998
        %1255 = vst [vmem:[%s203 + $0xc0] sm:$0xff] %v999
        %1256 = vst [vmem:[%s203 + $0xc8] sm:$0xff] %v1000
        %1257 = vst [vmem:[%s203 + $0xd0] sm:$0xff] %v1001
        %1258 = vst [vmem:[%s203 + $0xd8] sm:$0xff] %v1002
        %1259 = vst [vmem:[%s203 + $0xe0] sm:$0xff] %v1003
        %1260 = vst [vmem:[%s203 + $0xe8] sm:$0xff] %v1004
        %1261 = vst [vmem:[%s203 + $0xf0] sm:$0xff] %v1005
        %1262 = vst [vmem:[%s203 + $0xf8] sm:$0xff] %v1006
        %1263 = vst [vmem:[%s203 + $0x100] sm:$0xff] %v1007
        %1264 = vst [vmem:[%s203 + $0x108] sm:$0xff] %v1008
        %1265 = vst [vmem:[%s203 + $0x110] sm:$0xff] %v1009
        %1266 = vst [vmem:[%s203 + $0x118] sm:$0xff] %v1010
        %1267 = vst [vmem:[%s203 + $0x120] sm:$0xff] %v1011
        %1268 = vst [vmem:[%s203 + $0x128] sm:$0xff] %v1012
        %1269 = vst [vmem:[%s203 + $0x130] sm:$0xff] %v1013
        %1270 = vst [vmem:[%s203 + $0x138] sm:$0xff] %v1014
        %1271 = vst [vmem:[%s203 + $0x140] sm:$0xff] %v1015
        %1272 = vst [vmem:[%s203 + $0x148] sm:$0xff] %v1016
        %1273 = vst [vmem:[%s203 + $0x150] sm:$0xff] %v1017
        %1274 = vst [vmem:[%s203 + $0x158] sm:$0xff] %v1018
        %1275 = vst [vmem:[%s203 + $0x160] sm:$0xff] %v1019
        %1276 = vst [vmem:[%s203 + $0x168] sm:$0xff] %v1020
        %1277 = vst [vmem:[%s203 + $0x170] sm:$0xff] %v1021
        %1278 = vst [vmem:[%s203 + $0x178] sm:$0xff] %v1022
        %1279 = vst [vmem:[%s203 + $0x180] sm:$0xff] %v1023
        %1280 = vst [vmem:[%s203 + $0x188] sm:$0xff] %v1024
        %1281 = vst [vmem:[%s203 + $0x190] sm:$0xff] %v1025
        %1282 = vst [vmem:[%s203 + $0x198] sm:$0xff] %v1026
        %1283 = vst [vmem:[%s203 + $0x1a0] sm:$0xff] %v1027
        %1284 = vst [vmem:[%s203 + $0x1a8] sm:$0xff] %v1028
        %1285 = vst [vmem:[%s203 + $0x1b0] sm:$0xff] %v1029
        %1286 = vst [vmem:[%s203 + $0x1b8] sm:$0xff] %v1030
        %1287 = vst [vmem:[%s203 + $0x1c0] sm:$0xff] %v1031
        %1288 = vst [vmem:[%s203 + $0x1c8] sm:$0xff] %v1032
        %1289 = vst [vmem:[%s203 + $0x1d0] sm:$0xff] %v1033
        %1290 = vst [vmem:[%s203 + $0x1d8] sm:$0xff] %v1034
        %1291 = vst [vmem:[%s203 + $0x1e0] sm:$0xff] %v1035
        %1292 = vst [vmem:[%s203 + $0x1e8] sm:$0xff] %v1036
        %1293 = vst [vmem:[%s203 + $0x1f0] sm:$0xff] %v1037
        %1294 = vst [vmem:[%s203 + $0x1f8] sm:$0xff] %v1038
        %1295 = vst [vmem:[%s203 + $0x200] sm:$0xff] %v1039
        %1296 = vst [vmem:[%s203 + $0x208] sm:$0xff] %v1040
        %1297 = vst [vmem:[%s203 + $0x210] sm:$0xff] %v1041
        %1298 = vst [vmem:[%s203 + $0x218] sm:$0xff] %v1042
        %1299 = vst [vmem:[%s203 + $0x220] sm:$0xff] %v1043
        %1300 = vst [vmem:[%s203 + $0x228] sm:$0xff] %v1044
        %1301 = vst [vmem:[%s203 + $0x230] sm:$0xff] %v1045
        %1302 = vst [vmem:[%s203 + $0x238] sm:$0xff] %v1046
        %1303 = vst [vmem:[%s203 + $0x240] sm:$0xff] %v1047
        %1304 = vst [vmem:[%s203 + $0x248] sm:$0xff] %v1048
        %1305 = vst [vmem:[%s203 + $0x250] sm:$0xff] %v1049
        %1306 = vst [vmem:[%s203 + $0x258] sm:$0xff] %v1050
        %1307 = vst [vmem:[%s203 + $0x260] sm:$0xff] %v1051
        %1308 = vst [vmem:[%s203 + $0x268] sm:$0xff] %v1052
        %1309 = vst [vmem:[%s203 + $0x270] sm:$0xff] %v1053
        %1310 = vst [vmem:[%s203 + $0x278] sm:$0xff] %v1054
        %1311 = vst [vmem:[%s203 + $0x280] sm:$0xff] %v1055
        %1312 = vst [vmem:[%s203 + $0x288] sm:$0xff] %v1056
        %1313 = vst [vmem:[%s203 + $0x290] sm:$0xff] %v1057
        %1314 = vst [vmem:[%s203 + $0x298] sm:$0xff] %v1058
        %1315 = vst [vmem:[%s203 + $0x2a0] sm:$0xff] %v1059
        %1316 = vst [vmem:[%s203 + $0x2a8] sm:$0xff] %v1060
        %1317 = vst [vmem:[%s203 + $0x2b0] sm:$0xff] %v1061
        %1318 = vst [vmem:[%s203 + $0x2b8] sm:$0xff] %v1062
        %1319 = vst [vmem:[%s203 + $0x2c0] sm:$0xff] %v1063
        %1320 = vst [vmem:[%s203 + $0x2c8] sm:$0xff] %v1064
        %1321 = vst [vmem:[%s203 + $0x2d0] sm:$0xff] %v1065
        %1322 = vst [vmem:[%s203 + $0x2d8] sm:$0xff] %v1066
        %1323 = vst [vmem:[%s203 + $0x2e0] sm:$0xff] %v1067
        %1324 = vst [vmem:[%s203 + $0x2e8] sm:$0xff] %v1068
        %1325 = vst [vmem:[%s203 + $0x2f0] sm:$0xff] %v1069
        %1326 = vst [vmem:[%s203 + $0x2f8] sm:$0xff] %v1070
        %1327 = vst [vmem:[%s203 + $0x300] sm:$0xff] %v1071
        %1328 = vst [vmem:[%s203 + $0x308] sm:$0xff] %v1072
        %1329 = vst [vmem:[%s203 + $0x310] sm:$0xff] %v1073
        %1330 = vst [vmem:[%s203 + $0x318] sm:$0xff] %v1074
        %1331 = vst [vmem:[%s203 + $0x320] sm:$0xff] %v1075
        %1332 = vst [vmem:[%s203 + $0x328] sm:$0xff] %v1076
        %1333 = vst [vmem:[%s203 + $0x330] sm:$0xff] %v1077
        %1334 = vst [vmem:[%s203 + $0x338] sm:$0xff] %v1078
        %1335 = vst [vmem:[%s203 + $0x340] sm:$0xff] %v1079
        %1336 = vst [vmem:[%s203 + $0x348] sm:$0xff] %v1080
        %1337 = vst [vmem:[%s203 + $0x350] sm:$0xff] %v1081
        %1338 = vst [vmem:[%s203 + $0x358] sm:$0xff] %v1082
        %1339 = vst [vmem:[%s203 + $0x360] sm:$0xff] %v1083
        %1340 = vst [vmem:[%s203 + $0x368] sm:$0xff] %v1084
        %1341 = vst [vmem:[%s203 + $0x370] sm:$0xff] %v1085
        %1342 = vst [vmem:[%s203 + $0x378] sm:$0xff] %v1086
        %1343 = vst [vmem:[%s203 + $0x380] sm:$0xff] %v1087
        %1344 = vst [vmem:[%s203 + $0x388] sm:$0xff] %v1088
        %1345 = vst [vmem:[%s203 + $0x390] sm:$0xff] %v1089
        %1346 = vst [vmem:[%s203 + $0x398] sm:$0xff] %v1090
        %1347 = vst [vmem:[%s203 + $0x3a0] sm:$0xff] %v1091
        %1348 = vst [vmem:[%s203 + $0x3a8] sm:$0xff] %v1092
        %1349 = vst [vmem:[%s203 + $0x3b0] sm:$0xff] %v1093
        %1350 = vst [vmem:[%s203 + $0x3b8] sm:$0xff] %v1094
        %1351 = vst [vmem:[%s203 + $0x3c0] sm:$0xff] %v1095
        %1352 = vst [vmem:[%s203 + $0x3c8] sm:$0xff] %v1096
        %1353 = vst [vmem:[%s203 + $0x3d0] sm:$0xff] %v1097
        %1354 = vst [vmem:[%s203 + $0x3d8] sm:$0xff] %v1098
        %1355 = vst [vmem:[%s203 + $0x3e0] sm:$0xff] %v1099
        %1356 = vst [vmem:[%s203 + $0x3e8] sm:$0xff] %v1100
        %1357 = vst [vmem:[%s203 + $0x3f0] sm:$0xff] %v1101
        %1358 = vst [vmem:[%s203 + $0x3f8] sm:$0xff] %v1102
        %1359 = vst [vmem:[%s203 + $0x400] sm:$0xff] %v1103
        %1360 = vst [vmem:[%s203 + $0x408] sm:$0xff] %v1104
        %1361 = vst [vmem:[%s203 + $0x410] sm:$0xff] %v1105
        %1362 = vst [vmem:[%s203 + $0x418] sm:$0xff] %v1106
        %1363 = vst [vmem:[%s203 + $0x420] sm:$0xff] %v1107
        %1364 = vst [vmem:[%s203 + $0x428] sm:$0xff] %v1108
        %1365 = vst [vmem:[%s203 + $0x430] sm:$0xff] %v1109
        %1366 = vst [vmem:[%s203 + $0x438] sm:$0xff] %v1110
        %1367 = vst [vmem:[%s203 + $0x440] sm:$0xff] %v1111
        %1368 = vst [vmem:[%s203 + $0x448] sm:$0xff] %v1112
        %1369 = vst [vmem:[%s203 + $0x450] sm:$0xff] %v1113
        %1370 = vst [vmem:[%s203 + $0x458] sm:$0xff] %v1114
        %1371 = vst [vmem:[%s203 + $0x460] sm:$0xff] %v1115
        %1372 = vst [vmem:[%s203 + $0x468] sm:$0xff] %v1116
        %1373 = vst [vmem:[%s203 + $0x470] sm:$0xff] %v1117
        %1374 = vst [vmem:[%s203 + $0x478] sm:$0xff] %v1118
        %1375 = vst [vmem:[%s203 + $0x480] sm:$0xff] %v1119
        %1376 = vst [vmem:[%s203 + $0x488] sm:$0xff] %v1120
        %1377 = vst [vmem:[%s203 + $0x490] sm:$0xff] %v1121
        %1378 = vst [vmem:[%s203 + $0x498] sm:$0xff] %v1122
        %1379 = vst [vmem:[%s203 + $0x4a0] sm:$0xff] %v1123
        %1380 = vst [vmem:[%s203 + $0x4a8] sm:$0xff] %v1124
        %1381 = vst [vmem:[%s203 + $0x4b0] sm:$0xff] %v1125
        %1382 = vst [vmem:[%s203 + $0x4b8] sm:$0xff] %v1126
        %1383 = vst [vmem:[%s203 + $0x4c0] sm:$0xff] %v1127
        %1384 = vst [vmem:[%s203 + $0x4c8] sm:$0xff] %v1128
        %1385 = vst [vmem:[%s203 + $0x4d0] sm:$0xff] %v1129
        %1386 = vst [vmem:[%s203 + $0x4d8] sm:$0xff] %v1130
        %1387 = vst [vmem:[%s203 + $0x4e0] sm:$0xff] %v1131
        %1388 = vst [vmem:[%s203 + $0x4e8] sm:$0xff] %v1132
        %1389 = vst [vmem:[%s203 + $0x4f0] sm:$0xff] %v1133
        %1390 = vst [vmem:[%s203 + $0x4f8] sm:$0xff] %v1134
        %1391 = vst [vmem:[%s203 + $0x500] sm:$0xff] %v1135
        %1392 = vst [vmem:[%s203 + $0x508] sm:$0xff] %v1136
        %1393 = vst [vmem:[%s203 + $0x510] sm:$0xff] %v1137
        %1394 = vst [vmem:[%s203 + $0x518] sm:$0xff] %v1138
        %1395 = vst [vmem:[%s203 + $0x520] sm:$0xff] %v1139
        %1396 = vst [vmem:[%s203 + $0x528] sm:$0xff] %v1140
        %1397 = vst [vmem:[%s203 + $0x530] sm:$0xff] %v1141
        %1398 = vst [vmem:[%s203 + $0x538] sm:$0xff] %v1142
        %1399 = vst [vmem:[%s203 + $0x540] sm:$0xff] %v1143
        %1400 = vst [vmem:[%s203 + $0x548] sm:$0xff] %v1144
        %1401 = vst [vmem:[%s203 + $0x550] sm:$0xff] %v1145
        %1402 = vst [vmem:[%s203 + $0x558] sm:$0xff] %v1146
        %1403 = vst [vmem:[%s203 + $0x560] sm:$0xff] %v1147
        %1404 = vst [vmem:[%s203 + $0x568] sm:$0xff] %v1148
        %1405 = vst [vmem:[%s203 + $0x570] sm:$0xff] %v1149
        %1406 = vst [vmem:[%s203 + $0x578] sm:$0xff] %v1150
        %1407 = vst [vmem:[%s203 + $0x580] sm:$0xff] %v1151
        %1408 = vst [vmem:[%s203 + $0x588] sm:$0xff] %v1152
        %1409 = vst [vmem:[%s203 + $0x590] sm:$0xff] %v1153
        %1410 = vst [vmem:[%s203 + $0x598] sm:$0xff] %v1154
        %1411 = vst [vmem:[%s203 + $0x5a0] sm:$0xff] %v1155
        %1412 = vst [vmem:[%s203 + $0x5a8] sm:$0xff] %v1156
        %1413 = vst [vmem:[%s203 + $0x5b0] sm:$0xff] %v1157
        %1414 = vst [vmem:[%s203 + $0x5b8] sm:$0xff] %v1158
        %1415 = vst [vmem:[%s203 + $0x5c0] sm:$0xff] %v1159
        %1416 = vst [vmem:[%s203 + $0x5c8] sm:$0xff] %v1160
        %1417 = vst [vmem:[%s203 + $0x5d0] sm:$0xff] %v1161
        %1418 = vst [vmem:[%s203 + $0x5d8] sm:$0xff] %v1162
        %1419 = vst [vmem:[%s203 + $0x5e0] sm:$0xff] %v1163
        %1420 = vst [vmem:[%s203 + $0x5e8] sm:$0xff] %v1164
        %1421 = vst [vmem:[%s203 + $0x5f0] sm:$0xff] %v1165
        %1422 = vst [vmem:[%s203 + $0x5f8] sm:$0xff] %v1166
        %1423 = vst [vmem:[%s203 + $0x600] sm:$0xff] %v1167
        %1424 = vst [vmem:[%s203 + $0x608] sm:$0xff] %v1168
        %1425 = vst [vmem:[%s203 + $0x610] sm:$0xff] %v1169
        %1426 = vst [vmem:[%s203 + $0x618] sm:$0xff] %v1170
        %1427 = vst [vmem:[%s203 + $0x620] sm:$0xff] %v1171
        %1428 = vst [vmem:[%s203 + $0x628] sm:$0xff] %v1172
        %1429 = vst [vmem:[%s203 + $0x630] sm:$0xff] %v1173
        %1430 = vst [vmem:[%s203 + $0x638] sm:$0xff] %v1174
        %1431 = vst [vmem:[%s203 + $0x640] sm:$0xff] %v1175
        %1432 = vst [vmem:[%s203 + $0x648] sm:$0xff] %v1176
        %1433 = vst [vmem:[%s203 + $0x650] sm:$0xff] %v1177
        %1434 = vst [vmem:[%s203 + $0x658] sm:$0xff] %v1178
        %1435 = vst [vmem:[%s203 + $0x660] sm:$0xff] %v1179
        %1436 = vst [vmem:[%s203 + $0x668] sm:$0xff] %v1180
        %1437 = vst [vmem:[%s203 + $0x670] sm:$0xff] %v1181
        %1438 = vst [vmem:[%s203 + $0x678] sm:$0xff] %v1182
        %1439 = vst [vmem:[%s203 + $0x680] sm:$0xff] %v1183
        %1440 = vst [vmem:[%s203 + $0x688] sm:$0xff] %v1184
        %1441 = vst [vmem:[%s203 + $0x690] sm:$0xff] %v1185
        %1442 = vst [vmem:[%s203 + $0x698] sm:$0xff] %v1186
        %1443 = vst [vmem:[%s203 + $0x6a0] sm:$0xff] %v1187
        %1444 = vst [vmem:[%s203 + $0x6a8] sm:$0xff] %v1188
        %1445 = vst [vmem:[%s203 + $0x6b0] sm:$0xff] %v1189
        %1446 = vst [vmem:[%s203 + $0x6b8] sm:$0xff] %v1190
        %1447 = vst [vmem:[%s203 + $0x6c0] sm:$0xff] %v1191
        %1448 = vst [vmem:[%s203 + $0x6c8] sm:$0xff] %v1192
        %1449 = vst [vmem:[%s203 + $0x6d0] sm:$0xff] %v1193
        %1450 = vst [vmem:[%s203 + $0x6d8] sm:$0xff] %v1194
        %1451 = vst [vmem:[%s203 + $0x6e0] sm:$0xff] %v1195
        %1452 = vst [vmem:[%s203 + $0x6e8] sm:$0xff] %v1196
        %1453 = vst [vmem:[%s203 + $0x6f0] sm:$0xff] %v1197
        %1454 = vst [vmem:[%s203 + $0x6f8] sm:$0xff] %v1198
        %1455 = vst [vmem:[%s203 + $0x700] sm:$0xff] %v1199
        %1456 = vst [vmem:[%s203 + $0x708] sm:$0xff] %v1200
        %1457 = vst [vmem:[%s203 + $0x710] sm:$0xff] %v1201
        %1458 = vst [vmem:[%s203 + $0x718] sm:$0xff] %v1202
        %1459 = vst [vmem:[%s203 + $0x720] sm:$0xff] %v1203
        %1460 = vst [vmem:[%s203 + $0x728] sm:$0xff] %v1204
        %1461 = vst [vmem:[%s203 + $0x730] sm:$0xff] %v1205
        %1462 = vst [vmem:[%s203 + $0x738] sm:$0xff] %v1206
        %1463 = vst [vmem:[%s203 + $0x740] sm:$0xff] %v1207
        %1464 = vst [vmem:[%s203 + $0x748] sm:$0xff] %v1208
        %1465 = vst [vmem:[%s203 + $0x750] sm:$0xff] %v1209
        %1466 = vst [vmem:[%s203 + $0x758] sm:$0xff] %v1210
        %1467 = vst [vmem:[%s203 + $0x760] sm:$0xff] %v1211
        %1468 = vst [vmem:[%s203 + $0x768] sm:$0xff] %v1212
        %1469 = vst [vmem:[%s203 + $0x770] sm:$0xff] %v1213
        %1470 = vst [vmem:[%s203 + $0x778] sm:$0xff] %v1214
        %1471 = vst [vmem:[%s203 + $0x780] sm:$0xff] %v1215
        %1472 = vst [vmem:[%s203 + $0x788] sm:$0xff] %v1216
        %1473 = vst [vmem:[%s203 + $0x790] sm:$0xff] %v1217
        %1474 = vst [vmem:[%s203 + $0x798] sm:$0xff] %v1218
        %1475 = vst [vmem:[%s203 + $0x7a0] sm:$0xff] %v1219
        %1476 = vst [vmem:[%s203 + $0x7a8] sm:$0xff] %v1220
        %1477 = vst [vmem:[%s203 + $0x7b0] sm:$0xff] %v1221
        %1478 = vst [vmem:[%s203 + $0x7b8] sm:$0xff] %v1222
        %1479 = vst [vmem:[%s203 + $0x7c0] sm:$0xff] %v1223
        %1480 = vst [vmem:[%s203 + $0x7c8] sm:$0xff] %v1224
        %1481 = vst [vmem:[%s203 + $0x7d0] sm:$0xff] %v1225
        %1482 = vst [vmem:[%s203 + $0x7d8] sm:$0xff] %v1226
        %1483 = vst [vmem:[%s203 + $0x7e0] sm:$0xff] %v1227
        %1484 = vst [vmem:[%s203 + $0x7e8] sm:$0xff] %v1228
        %1485 = vst [vmem:[%s203 + $0x7f0] sm:$0xff] %v1229
        %1486 = vst [vmem:[%s203 + $0x7f8] sm:$0xff] %v1230
        %s1487 = sand.u32 %s82, 1
        %s1488 = scalar_lea.sflag [#allocation4], %s1487
        %s1489 = sand.u32 %s82, 1
        %s1490 = smul.addr %s1489, 2048
        %s1491 = scalar_lea.vmem [#allocation7], %s1490
        // Predicated region
        $region37: #{tpu_custom_call.1} parent=27 // pred_check
          %p1492 = pneg %p92
        $region38: #{tpu_custom_call.1} parent=27 // pred_check_branch
          %1494 = sbr.rel (%p1492) target = $region40
        $region39: #{tpu_custom_call.1} parent=27 // pred_region
          %s1495 = smul.u32 8, %s22
          %s1497 = ssub.s32 32768, 32768
          %1498 = vsyncadd %s1488, %s1497
          %s1499 = smul.addr %s1495, 32
          %s1500 = smul.addr %s1499, 128
          %s1501 = scalar_lea.hbm %s2, %s1500
          %s1502 = sshll.u32 %s1491, 4
          %s1503 = int_to_ptr.vmem [resolvable:$true] %s1502
          %1508 = dma.vmem_to_hbm [thread:$0]  %s1503, 32768, %s1501, %s1488, 4096, 4096, 256
        $region40: #{tpu_custom_call.1} parent=27 // pred_fallthru
          _
      $region28: #{tpu_custom_call.1} parent=5 // pred_fallthru
        _
      %p1509 = scmp.le.s32.totalorder 2, %s17
      // Predicated region
      $region41: #{tpu_custom_call.1} parent=5 // pred_check
        %p1510 = pneg %p1509
      $region42: #{tpu_custom_call.1} parent=5 // pred_check_branch
        %1512 = sbr.rel (%p1510) target = $region44
      $region43: #{tpu_custom_call.1} parent=5 // pred_region
        %s1513 = ssub.s32 %s17, 2
        // Predicated region
        $region45: #{tpu_custom_call.1} parent=43 // pred_check
          %p1514 = pneg %p98
        $region46: #{tpu_custom_call.1} parent=43 // pred_check_branch
          %1516 = sbr.rel (%p1514) target = $region48
        $region47: #{tpu_custom_call.1} parent=43 // pred_region
          %s1517 = sand.u32 %s83, 1
          %s1518 = scalar_lea.sflag [#allocation4], %s1517
          %s1519 = sand.u32 %s83, 1
          %s1520 = smul.addr %s1519, 2048
          %s1521 = scalar_lea.vmem [#allocation7], %s1520
          %1522 = dma.done %s1518, 32768
        $region48: #{tpu_custom_call.1} parent=43 // pred_fallthru
          _
      $region44: #{tpu_custom_call.1} parent=5 // pred_fallthru
        _
    $region6: #{tpu_custom_call.1} parent=1 // loop_footer
      %s21 = sadd.s32 1, %s17
    $region7: #{tpu_custom_call.1} parent=1 // loop_footer_branch
      %16 = sbr.rel target = $region3
    $region8: #{tpu_custom_call.1} parent=1 // loop_exit
      _
    %1523 = vsyncpa [#allocation3], 1
    %s1524 = scalar_lea.sflag [#allocation3], 1
    %1525 = vsyncpa %s1524, 1
    %1526 = vsyncpa [#allocation6], 1
    %s1527 = scalar_lea.sflag [#allocation6], 1
    %1528 = vsyncpa %s1527, 1
    %1529 = vsyncpa [#allocation4], 1
    %s1530 = scalar_lea.sflag [#allocation4], 1
    %1531 = vsyncpa %s1530, 1

</llo_original>
